<compile_context>
chip_gen: v7x
topology: tpu7x:2x2x1
jax: 0.10.0
libtpu: 0.0.40
codegen_flags: <defaults>
</compile_context>

<pallas_src>
import functools

import jax
import jax.numpy as jnp
import numpy as np
from jax.experimental import pallas as pl
from jax.experimental.pallas import tpu as pltpu


# ---------------------------------------------------------------------------
# Fused D_Block kernel (one batch element per grid step)
# ---------------------------------------------------------------------------
def _d_block_kernel(x_ref, mask_ref,
                    w1_ref, b1_ref,
                    w2_ref, b2_ref,
                    w3_ref, b3_ref,
                    wt_ref, bt_ref,
                    alpha_ref,
                    o_ref, *, H, W):
    """x_ref:    (1, Cp, L + 8*halo)  channel-padded, flattened, halo-extended input
       mask_ref: (1, L + 8*halo)      interior-pixel mask (global coords)
       w1/wt:    (Cp,  9*Cp)          im2col matmul weights (channel padded)
       w2:       (Cp, 18*Cp)          [x | o1] sources stacked along K
       w3:       (Cp, 27*Cp)          [x | o1 | o2] sources stacked along K
       b*_ref:   (Cp, 1)              biases
       alpha_ref:(3,) SMEM            PReLU slopes
       o_ref:    (1, Cp, L)           output on the padded 18x18 grid
    """
    Wp = W + 2
    L = (H + 2) * Wp           # flattened padded grid size (= 324 for 16x16)
    halo = Wp + 1              # max |3x3 tap offset| on the flattened grid

    def patches(sources, width):
        """im2col patch matrix for one or more (src, delta) pairs.

        Per-source row order is (tap, channel), matching the host-side weight
        packing; multiple sources are stacked along K so each conv is a single
        MXU matmul.  Every slice offset is static and in-bounds (shrinking
        halo), so taps are plain lane slices."""
        rows = []
        for src, delta in sources:
            for dy in (-1, 0, 1):
                for dx in (-1, 0, 1):
                    s = delta + dy * Wp + dx
                    rows.append(src[:, s:s + width])
        return jnp.concatenate(rows, axis=0)        # (n_src*9*Cp, width)

    def prelu(v, a):
        return jnp.where(v >= 0, v, a * v)

    def mm(w_ref, p):
        return jnp.dot(w_ref[...], p, preferred_element_type=jnp.float32)

    x = x_ref[0]                                    # (Cp, L + 8*halo)
    gmask = mask_ref[...]                           # (1, L + 8*halo)

    wd1 = L + 6 * halo                              # conv1 output width
    wd2 = L + 4 * halo                              # conv2 output width
    wd3 = L + 2 * halo                              # conv3 / residual width

    # conv_1 + PReLU                        (input: x)
    o1 = prelu(mm(w1_ref, patches([(x, halo)], wd1)) + b1_ref[...],
               alpha_ref[0])
    o1 = o1 * gmask[:, halo:halo + wd1]

    # conv_2 + PReLU                        (input: cat([x, o1]) -> K-stacked)
    o2 = prelu(mm(w2_ref, patches([(x, 2 * halo), (o1, halo)], wd2))
               + b2_ref[...], alpha_ref[1])
    o2 = o2 * gmask[:, 2 * halo:2 * halo + wd2]

    # conv_3 + PReLU                        (input: cat([x, o1, o2]))
    o3 = prelu(mm(w3_ref, patches([(x, 3 * halo), (o1, 2 * halo), (o2, halo)], wd3))
               + b3_ref[...], alpha_ref[2])
    o3 = o3 * gmask[:, 3 * halo:3 * halo + wd3]

    # residual add (both operands are zero outside the true interior)
    y = o3 + x[:, 3 * halo:3 * halo + wd3]

    # tail: conv (+ folded eval-mode BatchNorm) + ReLU
    out = jnp.maximum(mm(wt_ref, patches([(y, halo)], L)) + bt_ref[...], 0.0)
    o_ref[0] = out.astype(o_ref.dtype)


# ---------------------------------------------------------------------------
# Host-side packing helpers
# ---------------------------------------------------------------------------
def _ceil8(n):
    return ((n + 7) // 8) * 8


def _pack_w(w_hwio, cp_in, cp_out):
    """HWIO (3,3,cin,cout) -> (cp_out, 9*cp_in) matmul weight, channel-padded."""
    kh, kw, cin, cout = w_hwio.shape
    w = jnp.pad(w_hwio, ((0, 0), (0, 0), (0, cp_in - cin), (0, cp_out - cout)))
    return jnp.transpose(w.reshape(kh * kw * cp_in, cp_out))


def _pack_b(b, cp_out):
    return jnp.pad(b, (0, cp_out - b.shape[0])).reshape(cp_out, 1)


# ---------------------------------------------------------------------------
# D_Block forward (NCHW in / NCHW out, matching the PyTorch module)
# ---------------------------------------------------------------------------
def d_block_forward(x_nchw, params):
    N, Cin, H, W = x_nchw.shape
    c_half = Cin // 2
    Cout = params["wt"].shape[-1]
    Hp, Wp = H + 2, W + 2
    L = Hp * Wp
    halo = Wp + 1
    cp = _ceil8(max(Cin, Cout))            # padded channel count (sublane tile)
    ext = L + 8 * halo                     # 4 conv levels -> 4*halo on each side

    # Channel-pad to cp, zero spatial pad, flatten, extend with 4*halo zeros.
    x_pad = jnp.pad(x_nchw, ((0, 0), (0, cp - Cin), (1, 1), (1, 1)))
    x_ext = jnp.pad(x_pad.reshape(N, cp, L),
                    ((0, 0), (0, 0), (4 * halo, 4 * halo)))

    # Interior-pixel mask in the same (flattened, haloed) coordinate system.
    ii = (jnp.arange(Hp) >= 1) & (jnp.arange(Hp) <= H)
    jj = (jnp.arange(Wp) >= 1) & (jnp.arange(Wp) <= W)
    interior = (ii[:, None] & jj[None, :]).reshape(1, L).astype(jnp.float32)
    gmask = jnp.pad(interior, ((0, 0), (4 * halo, 4 * halo)))

    # Weights: split the concat inputs per source, pack as im2col matrices and
    # stack the sources along K so conv_2 / conv_3 are single matmuls.
    w1 = _pack_w(params["w1"], cp, cp)
    w2c = jnp.concatenate(
        [_pack_w(params["w2"][:, :, :Cin, :], cp, cp),
         _pack_w(params["w2"][:, :, Cin:, :], cp, cp)], axis=1)
    w3c = jnp.concatenate(
        [_pack_w(params["w3"][:, :, :Cin, :], cp, cp),
         _pack_w(params["w3"][:, :, Cin:Cin + c_half, :], cp, cp),
         _pack_w(params["w3"][:, :, Cin + c_half:, :], cp, cp)], axis=1)
    wt = _pack_w(params["wt"], cp, cp)
    b1, b2, b3, bt = (_pack_b(params[k], cp) for k in ("b1", "b2", "b3", "bt"))
    alphas = jnp.asarray([params["a1"], params["a2"], params["a3"]], jnp.float32)

    kdim = 9 * cp
    bspec = pl.BlockSpec((cp, 1), lambda n: (0, 0))

    out_flat = pl.pallas_call(
        functools.partial(_d_block_kernel, H=H, W=W),
        out_shape=jax.ShapeDtypeStruct((N, cp, L), jnp.float32),
        grid=(N,),
        in_specs=[
            pl.BlockSpec((1, cp, ext), lambda n: (n, 0, 0)),   # x (per batch elt)
            pl.BlockSpec((1, ext), lambda n: (0, 0)),          # interior mask
            pl.BlockSpec((cp, kdim), lambda n: (0, 0)), bspec,      # conv_1
            pl.BlockSpec((cp, 2 * kdim), lambda n: (0, 0)), bspec,  # conv_2
            pl.BlockSpec((cp, 3 * kdim), lambda n: (0, 0)), bspec,  # conv_3
            pl.BlockSpec((cp, kdim), lambda n: (0, 0)), bspec,      # tail conv
            pl.BlockSpec(memory_space=pltpu.MemorySpace.SMEM),      # PReLU slopes
        ],
        out_specs=pl.BlockSpec((1, cp, L), lambda n: (n, 0, 0)),
        compiler_params=pltpu.CompilerParams(
            dimension_semantics=("parallel",)),                # 2 TCs on v7x
    )(x_ext, gmask, w1, b1, w2c, b2, w3c, b3, wt, bt, alphas)

    # (N, cp, 324) lane-dense kernel output -> crop padding / channel padding.
    out = out_flat.reshape(N, cp, Hp, Wp)[:, :Cout, 1:H + 1, 1:W + 1]
    return out


# ---------------------------------------------------------------------------
# Parameter construction (deterministic, synthetic)
# ---------------------------------------------------------------------------
def make_params(channel_in, channel_out, key):
    c_half = channel_in // 2
    ks = jax.random.split(key, 16)

    def w(k, cin, cout, scale=0.1):
        # HWIO layout (kh, kw, Cin, Cout)
        return scale * jax.random.normal(k, (3, 3, cin, cout), jnp.float32)

    def b(k, cout, scale=0.05):
        return scale * jax.random.normal(k, (cout,), jnp.float32)

    p = {
        # conv_1: channel_in -> channel_in/2, PReLU (scalar slope, init 0.25)
        "w1": w(ks[0], channel_in, c_half), "b1": b(ks[1], c_half), "a1": 0.25,
        # conv_2: channel_in*3/2 -> channel_in/2
        "w2": w(ks[2], channel_in + c_half, c_half), "b2": b(ks[3], c_half), "a2": 0.25,
        # conv_3: channel_in*2 -> channel_in
        "w3": w(ks[4], 2 * channel_in, channel_in), "b3": b(ks[5], channel_in), "a3": 0.25,
    }

    # tail = B.conv(channel_in, channel_out, mode='CBR'):
    #   Conv2d(3x3, pad 1) -> BatchNorm2d(eps=1e-4, affine) -> ReLU
    wt = w(ks[6], channel_in, channel_out)
    bt = b(ks[7], channel_out)
    gamma = 1.0 + 0.1 * jax.random.normal(ks[8], (channel_out,), jnp.float32)
    beta = 0.05 * jax.random.normal(ks[9], (channel_out,), jnp.float32)
    run_mean = 0.05 * jax.random.normal(ks[10], (channel_out,), jnp.float32)
    run_var = 1.0 + 0.2 * jax.random.uniform(ks[11], (channel_out,), jnp.float32)
    eps = 1e-4
    # Fold eval-mode BatchNorm into the tail conv (exact rewrite).
    # TODO(synk): training-mode BatchNorm (batch statistics) not modeled; eval-mode only.
    scale = gamma / jnp.sqrt(run_var + eps)
    p["wt"] = wt * scale[None, None, None, :]
    p["bt"] = (bt - run_mean) * scale + beta
    return p


# ---------------------------------------------------------------------------
# Pure-JAX reference (same math, lax.conv) for a correctness check
# ---------------------------------------------------------------------------
def _conv_ref(x, w, b):
    y = jax.lax.conv_general_dilated(
        x, w, window_strides=(1, 1), padding="SAME",
        dimension_numbers=("NHWC", "HWIO", "NHWC"))
    return y + b[None, None, None, :]


def d_block_ref(x_nchw, p):
    x = jnp.transpose(x_nchw, (0, 2, 3, 1))
    prelu = lambda y, a: jnp.where(y >= 0, y, a * y)
    residual = x
    o1 = prelu(_conv_ref(x, p["w1"], p["b1"]), p["a1"])
    c1 = jnp.concatenate([x, o1], axis=-1)
    o2 = prelu(_conv_ref(c1, p["w2"], p["b2"]), p["a2"])
    c2 = jnp.concatenate([c1, o2], axis=-1)
    o3 = prelu(_conv_ref(c2, p["w3"], p["b3"]), p["a3"])
    out = o3 + residual
    out = jnp.maximum(_conv_ref(out, p["wt"], p["bt"]), 0.0)
    return jnp.transpose(out, (0, 3, 1, 2))


if __name__ == "__main__":
    key = jax.random.PRNGKey(0)
    k_x, k_p = jax.random.split(key)

    N, C_IN, C_OUT, H, W = 2, 4, 8, 16, 16
    x = jax.random.normal(k_x, (N, C_IN, H, W), jnp.float32)   # NCHW like PyTorch
    params = make_params(C_IN, C_OUT, k_p)

    out = d_block_forward(x, params)
    out = jax.block_until_ready(out)

    ref = jax.block_until_ready(d_block_ref(x, params))
    assert out.shape == (N, C_OUT, H, W), out.shape
    np.testing.assert_allclose(np.asarray(out), np.asarray(ref),
                               atol=1e-3, rtol=1e-3)
    print("KERNEL_OK")
</pallas_src>

<mosaic_0001>
module attributes {stable_mosaic.version = 11 : i64} {
  func.func @_d_block_kernel(%arg0: i32, %arg1: memref<1x8x476xf32, #tpu.memory_space<vmem>>, %arg2: memref<1x476xf32, #tpu.memory_space<vmem>>, %arg3: memref<8x72xf32, #tpu.memory_space<vmem>>, %arg4: memref<8x1xf32, #tpu.memory_space<vmem>>, %arg5: memref<8x144xf32, #tpu.memory_space<vmem>>, %arg6: memref<8x1xf32, #tpu.memory_space<vmem>>, %arg7: memref<8x216xf32, #tpu.memory_space<vmem>>, %arg8: memref<8x1xf32, #tpu.memory_space<vmem>>, %arg9: memref<8x72xf32, #tpu.memory_space<vmem>>, %arg10: memref<8x1xf32, #tpu.memory_space<vmem>>, %arg11: memref<3xf32, #tpu.memory_space<smem>>, %arg12: memref<1x8x324xf32, #tpu.memory_space<vmem>>) attributes {dimension_semantics = [#tpu.dimension_semantics<parallel>], iteration_bounds = array<i64: 2>, scalar_prefetch = 0 : i64, scratch_operands = 0 : i64, tpu.core_type = #tpu.core_type<tc>, window_params = [{transform_indices = @transform_0, window_bounds = array<i64: 1, 8, 476>}, {pipeline_mode = #tpu.pipeline_mode<synchronous>, transform_indices = @transform_1, window_bounds = array<i64: 1, 476>}, {pipeline_mode = #tpu.pipeline_mode<synchronous>, transform_indices = @transform_2, window_bounds = array<i64: 8, 72>}, {pipeline_mode = #tpu.pipeline_mode<synchronous>, transform_indices = @transform_3, window_bounds = array<i64: 8, 1>}, {pipeline_mode = #tpu.pipeline_mode<synchronous>, transform_indices = @transform_4, window_bounds = array<i64: 8, 144>}, {pipeline_mode = #tpu.pipeline_mode<synchronous>, transform_indices = @transform_5, window_bounds = array<i64: 8, 1>}, {pipeline_mode = #tpu.pipeline_mode<synchronous>, transform_indices = @transform_6, window_bounds = array<i64: 8, 216>}, {pipeline_mode = #tpu.pipeline_mode<synchronous>, transform_indices = @transform_7, window_bounds = array<i64: 8, 1>}, {pipeline_mode = #tpu.pipeline_mode<synchronous>, transform_indices = @transform_8, window_bounds = array<i64: 8, 72>}, {pipeline_mode = #tpu.pipeline_mode<synchronous>, transform_indices = @transform_9, window_bounds = array<i64: 8, 1>}, {transform_indices = @transform_10, window_bounds = array<i64: 3>}, {transform_indices = @transform_11, window_bounds = array<i64: 1, 8, 324>}]} {
    %c0 = arith.constant 0 : index
    %c0_0 = arith.constant 0 : index
    %c0_1 = arith.constant 0 : index
    %0 = vector.load %arg1[%c0, %c0_0, %c0_1] : memref<1x8x476xf32, #tpu.memory_space<vmem>>, vector<1x8x476xf32>
    %1 = vector.shape_cast %0 : vector<1x8x476xf32> to vector<8x476xf32>
    %c0_2 = arith.constant 0 : index
    %c0_3 = arith.constant 0 : index
    %2 = vector.load %arg2[%c0_2, %c0_3] : memref<1x476xf32, #tpu.memory_space<vmem>>, vector<1x476xf32>
    %3 = vector.extract_strided_slice %1 {offsets = [0, 0], sizes = [8, 438], strides = [1, 1]} : vector<8x476xf32> to vector<8x438xf32>
    %4 = vector.extract_strided_slice %1 {offsets = [0, 1], sizes = [8, 438], strides = [1, 1]} : vector<8x476xf32> to vector<8x438xf32>
    %5 = vector.extract_strided_slice %1 {offsets = [0, 2], sizes = [8, 438], strides = [1, 1]} : vector<8x476xf32> to vector<8x438xf32>
    %6 = vector.extract_strided_slice %1 {offsets = [0, 18], sizes = [8, 438], strides = [1, 1]} : vector<8x476xf32> to vector<8x438xf32>
    %7 = vector.extract_strided_slice %1 {offsets = [0, 19], sizes = [8, 438], strides = [1, 1]} : vector<8x476xf32> to vector<8x438xf32>
    %8 = vector.extract_strided_slice %1 {offsets = [0, 20], sizes = [8, 438], strides = [1, 1]} : vector<8x476xf32> to vector<8x438xf32>
    %9 = vector.extract_strided_slice %1 {offsets = [0, 36], sizes = [8, 438], strides = [1, 1]} : vector<8x476xf32> to vector<8x438xf32>
    %10 = vector.extract_strided_slice %1 {offsets = [0, 37], sizes = [8, 438], strides = [1, 1]} : vector<8x476xf32> to vector<8x438xf32>
    %11 = vector.extract_strided_slice %1 {offsets = [0, 38], sizes = [8, 438], strides = [1, 1]} : vector<8x476xf32> to vector<8x438xf32>
    %12 = tpu.concatenate %3, %4, %5, %6, %7, %8, %9, %10, %11 in 0 : vector<8x438xf32>, vector<8x438xf32>, vector<8x438xf32>, vector<8x438xf32>, vector<8x438xf32>, vector<8x438xf32>, vector<8x438xf32>, vector<8x438xf32>, vector<8x438xf32> -> vector<72x438xf32>
    %c0_4 = arith.constant 0 : index
    %c0_5 = arith.constant 0 : index
    %13 = vector.load %arg3[%c0_4, %c0_5] : memref<8x72xf32, #tpu.memory_space<vmem>>, vector<8x72xf32>
    %cst = arith.constant dense<0.000000e+00> : vector<8x438xf32>
    %14 = tpu.matmul %13, %12, %cst {dimension_numbers = #tpu.dot_dimension_numbers<[1], [0], [0], [1], [0, 0, 1, 1], [], []>} : vector<8x72xf32>, vector<72x438xf32>, vector<8x438xf32> -> vector<8x438xf32>
    %c0_6 = arith.constant 0 : index
    %c0_7 = arith.constant 0 : index
    %15 = vector.load %arg4[%c0_6, %c0_7] : memref<8x1xf32, #tpu.memory_space<vmem>>, vector<8x1xf32>
    %16 = vector.broadcast %15 : vector<8x1xf32> to vector<8x438xf32>
    %17 = arith.addf %14, %16 : vector<8x438xf32>
    %c0_8 = arith.constant 0 : index
    %18 = memref.load %arg11[%c0_8] : memref<3xf32, #tpu.memory_space<smem>>
    %cst_9 = arith.constant 0.000000e+00 : f32
    %19 = vector.broadcast %cst_9 : f32 to vector<8x438xf32>
    %20 = arith.cmpf oge, %17, %19 : vector<8x438xf32>
    %21 = vector.broadcast %18 : f32 to vector<8x438xf32>
    %22 = arith.mulf %21, %17 : vector<8x438xf32>
    %23 = arith.select %20, %17, %22 : vector<8x438xi1>, vector<8x438xf32>
    %24 = vector.extract_strided_slice %2 {offsets = [0, 19], sizes = [1, 438], strides = [1, 1]} : vector<1x476xf32> to vector<1x438xf32>
    %25 = vector.broadcast %24 : vector<1x438xf32> to vector<8x438xf32>
    %26 = arith.mulf %23, %25 : vector<8x438xf32>
    %27 = vector.extract_strided_slice %1 {offsets = [0, 19], sizes = [8, 400], strides = [1, 1]} : vector<8x476xf32> to vector<8x400xf32>
    %28 = vector.extract_strided_slice %1 {offsets = [0, 20], sizes = [8, 400], strides = [1, 1]} : vector<8x476xf32> to vector<8x400xf32>
    %29 = vector.extract_strided_slice %1 {offsets = [0, 21], sizes = [8, 400], strides = [1, 1]} : vector<8x476xf32> to vector<8x400xf32>
    %30 = vector.extract_strided_slice %1 {offsets = [0, 37], sizes = [8, 400], strides = [1, 1]} : vector<8x476xf32> to vector<8x400xf32>
    %31 = vector.extract_strided_slice %1 {offsets = [0, 38], sizes = [8, 400], strides = [1, 1]} : vector<8x476xf32> to vector<8x400xf32>
    %32 = vector.extract_strided_slice %1 {offsets = [0, 39], sizes = [8, 400], strides = [1, 1]} : vector<8x476xf32> to vector<8x400xf32>
    %33 = vector.extract_strided_slice %1 {offsets = [0, 55], sizes = [8, 400], strides = [1, 1]} : vector<8x476xf32> to vector<8x400xf32>
    %34 = vector.extract_strided_slice %1 {offsets = [0, 56], sizes = [8, 400], strides = [1, 1]} : vector<8x476xf32> to vector<8x400xf32>
    %35 = vector.extract_strided_slice %1 {offsets = [0, 57], sizes = [8, 400], strides = [1, 1]} : vector<8x476xf32> to vector<8x400xf32>
    %36 = vector.extract_strided_slice %26 {offsets = [0, 0], sizes = [8, 400], strides = [1, 1]} : vector<8x438xf32> to vector<8x400xf32>
    %37 = vector.extract_strided_slice %26 {offsets = [0, 1], sizes = [8, 400], strides = [1, 1]} : vector<8x438xf32> to vector<8x400xf32>
    %38 = vector.extract_strided_slice %26 {offsets = [0, 2], sizes = [8, 400], strides = [1, 1]} : vector<8x438xf32> to vector<8x400xf32>
    %39 = vector.extract_strided_slice %26 {offsets = [0, 18], sizes = [8, 400], strides = [1, 1]} : vector<8x438xf32> to vector<8x400xf32>
    %40 = vector.extract_strided_slice %26 {offsets = [0, 19], sizes = [8, 400], strides = [1, 1]} : vector<8x438xf32> to vector<8x400xf32>
    %41 = vector.extract_strided_slice %26 {offsets = [0, 20], sizes = [8, 400], strides = [1, 1]} : vector<8x438xf32> to vector<8x400xf32>
    %42 = vector.extract_strided_slice %26 {offsets = [0, 36], sizes = [8, 400], strides = [1, 1]} : vector<8x438xf32> to vector<8x400xf32>
    %43 = vector.extract_strided_slice %26 {offsets = [0, 37], sizes = [8, 400], strides = [1, 1]} : vector<8x438xf32> to vector<8x400xf32>
    %44 = vector.extract_strided_slice %26 {offsets = [0, 38], sizes = [8, 400], strides = [1, 1]} : vector<8x438xf32> to vector<8x400xf32>
    %45 = tpu.concatenate %27, %28, %29, %30, %31, %32, %33, %34, %35, %36, %37, %38, %39, %40, %41, %42 in 0 : vector<8x400xf32>, vector<8x400xf32>, vector<8x400xf32>, vector<8x400xf32>, vector<8x400xf32>, vector<8x400xf32>, vector<8x400xf32>, vector<8x400xf32>, vector<8x400xf32>, vector<8x400xf32>, vector<8x400xf32>, vector<8x400xf32>, vector<8x400xf32>, vector<8x400xf32>, vector<8x400xf32>, vector<8x400xf32> -> vector<128x400xf32>
    %46 = tpu.concatenate %43, %44 in 0 : vector<8x400xf32>, vector<8x400xf32> -> vector<16x400xf32>
    %47 = tpu.concatenate %45, %46 in 0 : vector<128x400xf32>, vector<16x400xf32> -> vector<144x400xf32>
    %c0_10 = arith.constant 0 : index
    %c0_11 = arith.constant 0 : index
    %48 = vector.load %arg5[%c0_10, %c0_11] : memref<8x144xf32, #tpu.memory_space<vmem>>, vector<8x144xf32>
    %cst_12 = arith.constant dense<0.000000e+00> : vector<8x400xf32>
    %49 = tpu.matmul %48, %47, %cst_12 {dimension_numbers = #tpu.dot_dimension_numbers<[1], [0], [0], [1], [0, 0, 1, 1], [], []>} : vector<8x144xf32>, vector<144x400xf32>, vector<8x400xf32> -> vector<8x400xf32>
    %c0_13 = arith.constant 0 : index
    %c0_14 = arith.constant 0 : index
    %50 = vector.load %arg6[%c0_13, %c0_14] : memref<8x1xf32, #tpu.memory_space<vmem>>, vector<8x1xf32>
    %51 = vector.broadcast %50 : vector<8x1xf32> to vector<8x400xf32>
    %52 = arith.addf %49, %51 : vector<8x400xf32>
    %c1 = arith.constant 1 : index
    %53 = memref.load %arg11[%c1] : memref<3xf32, #tpu.memory_space<smem>>
    %cst_15 = arith.constant 0.000000e+00 : f32
    %54 = vector.broadcast %cst_15 : f32 to vector<8x400xf32>
    %55 = arith.cmpf oge, %52, %54 : vector<8x400xf32>
    %56 = vector.broadcast %53 : f32 to vector<8x400xf32>
    %57 = arith.mulf %56, %52 : vector<8x400xf32>
    %58 = arith.select %55, %52, %57 : vector<8x400xi1>, vector<8x400xf32>
    %59 = vector.extract_strided_slice %2 {offsets = [0, 38], sizes = [1, 400], strides = [1, 1]} : vector<1x476xf32> to vector<1x400xf32>
    %60 = vector.broadcast %59 : vector<1x400xf32> to vector<8x400xf32>
    %61 = arith.mulf %58, %60 : vector<8x400xf32>
    %62 = vector.extract_strided_slice %1 {offsets = [0, 38], sizes = [8, 362], strides = [1, 1]} : vector<8x476xf32> to vector<8x362xf32>
    %63 = vector.extract_strided_slice %1 {offsets = [0, 39], sizes = [8, 362], strides = [1, 1]} : vector<8x476xf32> to vector<8x362xf32>
    %64 = vector.extract_strided_slice %1 {offsets = [0, 40], sizes = [8, 362], strides = [1, 1]} : vector<8x476xf32> to vector<8x362xf32>
    %65 = vector.extract_strided_slice %1 {offsets = [0, 56], sizes = [8, 362], strides = [1, 1]} : vector<8x476xf32> to vector<8x362xf32>
    %66 = vector.extract_strided_slice %1 {offsets = [0, 57], sizes = [8, 362], strides = [1, 1]} : vector<8x476xf32> to vector<8x362xf32>
    %67 = vector.extract_strided_slice %1 {offsets = [0, 58], sizes = [8, 362], strides = [1, 1]} : vector<8x476xf32> to vector<8x362xf32>
    %68 = vector.extract_strided_slice %1 {offsets = [0, 74], sizes = [8, 362], strides = [1, 1]} : vector<8x476xf32> to vector<8x362xf32>
    %69 = vector.extract_strided_slice %1 {offsets = [0, 75], sizes = [8, 362], strides = [1, 1]} : vector<8x476xf32> to vector<8x362xf32>
    %70 = vector.extract_strided_slice %1 {offsets = [0, 76], sizes = [8, 362], strides = [1, 1]} : vector<8x476xf32> to vector<8x362xf32>
    %71 = vector.extract_strided_slice %26 {offsets = [0, 19], sizes = [8, 362], strides = [1, 1]} : vector<8x438xf32> to vector<8x362xf32>
    %72 = vector.extract_strided_slice %26 {offsets = [0, 20], sizes = [8, 362], strides = [1, 1]} : vector<8x438xf32> to vector<8x362xf32>
    %73 = vector.extract_strided_slice %26 {offsets = [0, 21], sizes = [8, 362], strides = [1, 1]} : vector<8x438xf32> to vector<8x362xf32>
    %74 = vector.extract_strided_slice %26 {offsets = [0, 37], sizes = [8, 362], strides = [1, 1]} : vector<8x438xf32> to vector<8x362xf32>
    %75 = vector.extract_strided_slice %26 {offsets = [0, 38], sizes = [8, 362], strides = [1, 1]} : vector<8x438xf32> to vector<8x362xf32>
    %76 = vector.extract_strided_slice %26 {offsets = [0, 39], sizes = [8, 362], strides = [1, 1]} : vector<8x438xf32> to vector<8x362xf32>
    %77 = vector.extract_strided_slice %26 {offsets = [0, 55], sizes = [8, 362], strides = [1, 1]} : vector<8x438xf32> to vector<8x362xf32>
    %78 = vector.extract_strided_slice %26 {offsets = [0, 56], sizes = [8, 362], strides = [1, 1]} : vector<8x438xf32> to vector<8x362xf32>
    %79 = vector.extract_strided_slice %26 {offsets = [0, 57], sizes = [8, 362], strides = [1, 1]} : vector<8x438xf32> to vector<8x362xf32>
    %80 = vector.extract_strided_slice %61 {offsets = [0, 0], sizes = [8, 362], strides = [1, 1]} : vector<8x400xf32> to vector<8x362xf32>
    %81 = vector.extract_strided_slice %61 {offsets = [0, 1], sizes = [8, 362], strides = [1, 1]} : vector<8x400xf32> to vector<8x362xf32>
    %82 = vector.extract_strided_slice %61 {offsets = [0, 2], sizes = [8, 362], strides = [1, 1]} : vector<8x400xf32> to vector<8x362xf32>
    %83 = vector.extract_strided_slice %61 {offsets = [0, 18], sizes = [8, 362], strides = [1, 1]} : vector<8x400xf32> to vector<8x362xf32>
    %84 = vector.extract_strided_slice %61 {offsets = [0, 19], sizes = [8, 362], strides = [1, 1]} : vector<8x400xf32> to vector<8x362xf32>
    %85 = vector.extract_strided_slice %61 {offsets = [0, 20], sizes = [8, 362], strides = [1, 1]} : vector<8x400xf32> to vector<8x362xf32>
    %86 = vector.extract_strided_slice %61 {offsets = [0, 36], sizes = [8, 362], strides = [1, 1]} : vector<8x400xf32> to vector<8x362xf32>
    %87 = vector.extract_strided_slice %61 {offsets = [0, 37], sizes = [8, 362], strides = [1, 1]} : vector<8x400xf32> to vector<8x362xf32>
    %88 = vector.extract_strided_slice %61 {offsets = [0, 38], sizes = [8, 362], strides = [1, 1]} : vector<8x400xf32> to vector<8x362xf32>
    %89 = tpu.concatenate %62, %63, %64, %65, %66, %67, %68, %69, %70, %71, %72, %73, %74, %75, %76, %77 in 0 : vector<8x362xf32>, vector<8x362xf32>, vector<8x362xf32>, vector<8x362xf32>, vector<8x362xf32>, vector<8x362xf32>, vector<8x362xf32>, vector<8x362xf32>, vector<8x362xf32>, vector<8x362xf32>, vector<8x362xf32>, vector<8x362xf32>, vector<8x362xf32>, vector<8x362xf32>, vector<8x362xf32>, vector<8x362xf32> -> vector<128x362xf32>
    %90 = tpu.concatenate %78, %79, %80, %81, %82, %83, %84, %85, %86, %87, %88 in 0 : vector<8x362xf32>, vector<8x362xf32>, vector<8x362xf32>, vector<8x362xf32>, vector<8x362xf32>, vector<8x362xf32>, vector<8x362xf32>, vector<8x362xf32>, vector<8x362xf32>, vector<8x362xf32>, vector<8x362xf32> -> vector<88x362xf32>
    %91 = tpu.concatenate %89, %90 in 0 : vector<128x362xf32>, vector<88x362xf32> -> vector<216x362xf32>
    %c0_16 = arith.constant 0 : index
    %c0_17 = arith.constant 0 : index
    %92 = vector.load %arg7[%c0_16, %c0_17] : memref<8x216xf32, #tpu.memory_space<vmem>>, vector<8x216xf32>
    %cst_18 = arith.constant dense<0.000000e+00> : vector<8x362xf32>
    %93 = tpu.matmul %92, %91, %cst_18 {dimension_numbers = #tpu.dot_dimension_numbers<[1], [0], [0], [1], [0, 0, 1, 1], [], []>} : vector<8x216xf32>, vector<216x362xf32>, vector<8x362xf32> -> vector<8x362xf32>
    %c0_19 = arith.constant 0 : index
    %c0_20 = arith.constant 0 : index
    %94 = vector.load %arg8[%c0_19, %c0_20] : memref<8x1xf32, #tpu.memory_space<vmem>>, vector<8x1xf32>
    %95 = vector.broadcast %94 : vector<8x1xf32> to vector<8x362xf32>
    %96 = arith.addf %93, %95 : vector<8x362xf32>
    %c2 = arith.constant 2 : index
    %97 = memref.load %arg11[%c2] : memref<3xf32, #tpu.memory_space<smem>>
    %cst_21 = arith.constant 0.000000e+00 : f32
    %98 = vector.broadcast %cst_21 : f32 to vector<8x362xf32>
    %99 = arith.cmpf oge, %96, %98 : vector<8x362xf32>
    %100 = vector.broadcast %97 : f32 to vector<8x362xf32>
    %101 = arith.mulf %100, %96 : vector<8x362xf32>
    %102 = arith.select %99, %96, %101 : vector<8x362xi1>, vector<8x362xf32>
    %103 = vector.extract_strided_slice %2 {offsets = [0, 57], sizes = [1, 362], strides = [1, 1]} : vector<1x476xf32> to vector<1x362xf32>
    %104 = vector.broadcast %103 : vector<1x362xf32> to vector<8x362xf32>
    %105 = arith.mulf %102, %104 : vector<8x362xf32>
    %106 = vector.extract_strided_slice %1 {offsets = [0, 57], sizes = [8, 362], strides = [1, 1]} : vector<8x476xf32> to vector<8x362xf32>
    %107 = arith.addf %105, %106 : vector<8x362xf32>
    %108 = vector.extract_strided_slice %107 {offsets = [0, 0], sizes = [8, 324], strides = [1, 1]} : vector<8x362xf32> to vector<8x324xf32>
    %109 = vector.extract_strided_slice %107 {offsets = [0, 1], sizes = [8, 324], strides = [1, 1]} : vector<8x362xf32> to vector<8x324xf32>
    %110 = vector.extract_strided_slice %107 {offsets = [0, 2], sizes = [8, 324], strides = [1, 1]} : vector<8x362xf32> to vector<8x324xf32>
    %111 = vector.extract_strided_slice %107 {offsets = [0, 18], sizes = [8, 324], strides = [1, 1]} : vector<8x362xf32> to vector<8x324xf32>
    %112 = vector.extract_strided_slice %107 {offsets = [0, 19], sizes = [8, 324], strides = [1, 1]} : vector<8x362xf32> to vector<8x324xf32>
    %113 = vector.extract_strided_slice %107 {offsets = [0, 20], sizes = [8, 324], strides = [1, 1]} : vector<8x362xf32> to vector<8x324xf32>
    %114 = vector.extract_strided_slice %107 {offsets = [0, 36], sizes = [8, 324], strides = [1, 1]} : vector<8x362xf32> to vector<8x324xf32>
    %115 = vector.extract_strided_slice %107 {offsets = [0, 37], sizes = [8, 324], strides = [1, 1]} : vector<8x362xf32> to vector<8x324xf32>
    %116 = vector.extract_strided_slice %107 {offsets = [0, 38], sizes = [8, 324], strides = [1, 1]} : vector<8x362xf32> to vector<8x324xf32>
    %117 = tpu.concatenate %108, %109, %110, %111, %112, %113, %114, %115, %116 in 0 : vector<8x324xf32>, vector<8x324xf32>, vector<8x324xf32>, vector<8x324xf32>, vector<8x324xf32>, vector<8x324xf32>, vector<8x324xf32>, vector<8x324xf32>, vector<8x324xf32> -> vector<72x324xf32>
    %c0_22 = arith.constant 0 : index
    %c0_23 = arith.constant 0 : index
    %118 = vector.load %arg9[%c0_22, %c0_23] : memref<8x72xf32, #tpu.memory_space<vmem>>, vector<8x72xf32>
    %cst_24 = arith.constant dense<0.000000e+00> : vector<8x324xf32>
    %119 = tpu.matmul %118, %117, %cst_24 {dimension_numbers = #tpu.dot_dimension_numbers<[1], [0], [0], [1], [0, 0, 1, 1], [], []>} : vector<8x72xf32>, vector<72x324xf32>, vector<8x324xf32> -> vector<8x324xf32>
    %c0_25 = arith.constant 0 : index
    %c0_26 = arith.constant 0 : index
    %120 = vector.load %arg10[%c0_25, %c0_26] : memref<8x1xf32, #tpu.memory_space<vmem>>, vector<8x1xf32>
    %121 = vector.broadcast %120 : vector<8x1xf32> to vector<8x324xf32>
    %122 = arith.addf %119, %121 : vector<8x324xf32>
    %cst_27 = arith.constant 0.000000e+00 : f32
    %123 = vector.broadcast %cst_27 : f32 to vector<8x324xf32>
    %124 = arith.maximumf %122, %123 : vector<8x324xf32>
    %c0_28 = arith.constant 0 : index
    %c0_29 = arith.constant 0 : index
    %c0_30 = arith.constant 0 : index
    %125 = vector.load %arg12[%c0_28, %c0_29, %c0_30] : memref<1x8x324xf32, #tpu.memory_space<vmem>>, vector<1x8x324xf32>
    %126 = vector.shape_cast %125 : vector<1x8x324xf32> to vector<8x324xf32>
    %127 = vector.shape_cast %124 : vector<8x324xf32> to vector<1x8x324xf32>
    tpu.vector_store %arg12[%c0_28, %c0_29, %c0_30], %127 {strides = array<i32>} : memref<1x8x324xf32, #tpu.memory_space<vmem>>, vector<1x8x324xf32>,
    return
  }
  func.func @transform_0(%arg0: i32) -> (i32, i32, i32) {
    %c0_i32 = arith.constant 0 : i32
    %c0_i32_0 = arith.constant 0 : i32
    %c0_i32_1 = arith.constant 0 : i32
    return %arg0, %c0_i32, %c0_i32_0 : i32, i32, i32
  }
  func.func @transform_1(%arg0: i32) -> (i32, i32) {
    %c0_i32 = arith.constant 0 : i32
    %c0_i32_0 = arith.constant 0 : i32
    %c0_i32_1 = arith.constant 0 : i32
    return %c0_i32, %c0_i32_0 : i32, i32
  }
  func.func @transform_2(%arg0: i32) -> (i32, i32) {
    %c0_i32 = arith.constant 0 : i32
    %c0_i32_0 = arith.constant 0 : i32
    %c0_i32_1 = arith.constant 0 : i32
    return %c0_i32, %c0_i32_0 : i32, i32
  }
  func.func @transform_3(%arg0: i32) -> (i32, i32) {
    %c0_i32 = arith.constant 0 : i32
    %c0_i32_0 = arith.constant 0 : i32
    %c0_i32_1 = arith.constant 0 : i32
    return %c0_i32, %c0_i32_0 : i32, i32
  }
  func.func @transform_4(%arg0: i32) -> (i32, i32) {
    %c0_i32 = arith.constant 0 : i32
    %c0_i32_0 = arith.constant 0 : i32
    %c0_i32_1 = arith.constant 0 : i32
    return %c0_i32, %c0_i32_0 : i32, i32
  }
  func.func @transform_5(%arg0: i32) -> (i32, i32) {
    %c0_i32 = arith.constant 0 : i32
    %c0_i32_0 = arith.constant 0 : i32
    %c0_i32_1 = arith.constant 0 : i32
    return %c0_i32, %c0_i32_0 : i32, i32
  }
  func.func @transform_6(%arg0: i32) -> (i32, i32) {
    %c0_i32 = arith.constant 0 : i32
    %c0_i32_0 = arith.constant 0 : i32
    %c0_i32_1 = arith.constant 0 : i32
    return %c0_i32, %c0_i32_0 : i32, i32
  }
  func.func @transform_7(%arg0: i32) -> (i32, i32) {
    %c0_i32 = arith.constant 0 : i32
    %c0_i32_0 = arith.constant 0 : i32
    %c0_i32_1 = arith.constant 0 : i32
    return %c0_i32, %c0_i32_0 : i32, i32
  }
  func.func @transform_8(%arg0: i32) -> (i32, i32) {
    %c0_i32 = arith.constant 0 : i32
    %c0_i32_0 = arith.constant 0 : i32
    %c0_i32_1 = arith.constant 0 : i32
    return %c0_i32, %c0_i32_0 : i32, i32
  }
  func.func @transform_9(%arg0: i32) -> (i32, i32) {
    %c0_i32 = arith.constant 0 : i32
    %c0_i32_0 = arith.constant 0 : i32
    %c0_i32_1 = arith.constant 0 : i32
    return %c0_i32, %c0_i32_0 : i32, i32
  }
  func.func @transform_10(%arg0: i32) -> i32 {
    %c0_i32 = arith.constant 0 : i32
    %c0_i32_0 = arith.constant 0 : i32
    return %c0_i32 : i32
  }
  func.func @transform_11(%arg0: i32) -> (i32, i32, i32) {
    %c0_i32 = arith.constant 0 : i32
    %c0_i32_0 = arith.constant 0 : i32
    %c0_i32_1 = arith.constant 0 : i32
    return %arg0, %c0_i32, %c0_i32_0 : i32, i32, i32
  }
}

</mosaic_0001>

<llo_original>
// kernel: tpu_custom_call.1
$region0: #{tpu_custom_call.1}
  #allocation0 [shape = 'u32[]', space=smem, size = 0x4, offset = 0x4, fixed_abs, tag = 'smem constant byte address 0x4 - core index']
  #allocation1 [shape = 'u32[144,128]{1,0:T(1,128)}', space=vmem, size = 0x12000, scoped, tag = 'internal scratch']
  %s0 = inlined_call_operand.hbm [shape: f32[2,8,476], index: 0, kind: input, shape index: {}]
  %s1 = inlined_call_operand.hbm [shape: f32[1,476], index: 1, kind: input, shape index: {}]
  %s2 = inlined_call_operand.vmem [shape: f32[8,72], index: 2, kind: input, shape index: {}]
  %s3 = inlined_call_operand.vmem [shape: f32[8,1], index: 3, kind: input, shape index: {}]
  %s4 = inlined_call_operand.vmem [shape: f32[8,144], index: 4, kind: input, shape index: {}]
  %s5 = inlined_call_operand.vmem [shape: f32[8,1], index: 5, kind: input, shape index: {}]
  %s6 = inlined_call_operand.vmem [shape: f32[8,216], index: 6, kind: input, shape index: {}]
  %s7 = inlined_call_operand.vmem [shape: f32[8,1], index: 7, kind: input, shape index: {}]
  %s8 = inlined_call_operand.vmem [shape: f32[8,72], index: 8, kind: input, shape index: {}]
  %s9 = inlined_call_operand.vmem [shape: f32[8,1], index: 9, kind: input, shape index: {}]
  %s10 = inlined_call_operand.vmem [shape: f32[3], index: 10, kind: input, shape index: {}]
  %s11 = inlined_call_operand.hbm [shape: f32[2,8,324], index: 11, kind: output, shape index: {}]
  %s12 = sld [smem:[#allocation0]]
  $region89: #{tpu_custom_call.1} parent=0
    _
  %s14 = ssub.s32 1, %s12
  %s15 = scalar_select 0, %s14, %s12
  $region1: #{tpu_custom_call.1} parent=0
    #allocation2 [shape = 'u8[32768]{0}', space=vmem, size = 0x8000, scoped, tag = 'input window, operand 0']
    #allocation3 [shape = 's32[2]{0}', space=sflag, size = 0x8, scoped, tag = 'scoped memory for tpu_custom_call.1']
    #allocation4 [shape = 's32[2]{0}', space=sflag, size = 0x8, scoped, tag = 'scoped memory for tpu_custom_call.1']
    #allocation5 [shape = 's32[2]{0}', space=sflag, size = 0x8, scoped, tag = 'scoped memory for tpu_custom_call.1']
    #allocation6 [shape = 'u8[2048]{0}', space=vmem, size = 0x800, scoped, tag = 'input window, operand 1, single buffered']
    #allocation7 [shape = 's32[1]{0}', space=sflag, size = 0x4, scoped, tag = 'scoped memory for tpu_custom_call.1']
    #allocation8 [shape = 'u8[512]{0}', space=smem, size = 0x200, scoped, tag = 'input window, operand 10, single buffered']
    #allocation9 [shape = 'u8[24576]{0}', space=vmem, size = 0x6000, scoped, tag = 'output window, operand 0']
    %16 = vsyncpa [#allocation3], 0
    %s17 = scalar_lea.sflag [#allocation3], 1
    %18 = vsyncpa %s17, 0
    %19 = vsyncpa [#allocation7], 0
    %20 = vsyncpa [#allocation5], 0
    %21 = vsyncpa [#allocation4], 0
    %s22 = scalar_lea.sflag [#allocation4], 1
    %23 = vsyncpa %s22, 0
    loop: start=0, step=1, limit=4
    $region2: #{tpu_custom_call.1} parent=1 // loop_pre_header
      _
    $region3: #{tpu_custom_call.1} parent=1 // loop_header
      %s25 = sphi 0, %s29
      %p26 = scmp.ge.s32.totalorder %s25, 4
      %s35 = sphi 0, %s37
      %s38 = sphi 0, %s35
      %s39 = sphi 0, %s38
      %s55 = sphi 0, %s39
      %s59 = sphi 0, %s59
      %s61 = sphi 0, %s59
      %s62 = sphi 0, %s61
      %s76 = sphi 0, %s62
      %s80 = sphi 0, %s80
      %s82 = sphi 0, %s80
      %s83 = sphi 0, %s82
      %s97 = sphi 0, %s83
      %s101 = sphi 0, %s101
      %s103 = sphi 0, %s101
      %s104 = sphi 0, %s103
      %s118 = sphi 0, %s104
      %s122 = sphi 0, %s122
      %s124 = sphi 0, %s122
      %s125 = sphi 0, %s124
      %s139 = sphi 0, %s125
      %s143 = sphi 0, %s143
      %s145 = sphi 0, %s143
      %s146 = sphi 0, %s145
      %s160 = sphi 0, %s146
      %s164 = sphi 0, %s164
      %s166 = sphi 0, %s164
      %s167 = sphi 0, %s166
      %s181 = sphi 0, %s167
      %s185 = sphi 0, %s185
      %s187 = sphi 0, %s185
      %s188 = sphi 0, %s187
      %s202 = sphi 0, %s188
      %s206 = sphi 0, %s206
      %s208 = sphi 0, %s206
      %s209 = sphi 0, %s208
      %s223 = sphi 0, %s209
      %s227 = sphi 0, %s227
      %s229 = sphi 0, %s227
      %s230 = sphi 0, %s229
      %s244 = sphi 0, %s230
      %s248 = sphi 0, %s248
      %s250 = sphi 0, %s248
      %s251 = sphi 0, %s250
      %s265 = sphi 0, %s251
      %s271 = sphi 0, %s273
      %s274 = sphi 0, %s271
      %s275 = sphi 0, %s274
      %s291 = sphi 0, %s275
    $region4: #{tpu_custom_call.1} parent=1 // loop_header_branch
      %28 = sbr.rel (%p26) target = $region8
    $region5: #{tpu_custom_call.1} parent=1 // loop_body
      %s30 = ssub.s32 %s25, 1
      %s31 = ssub.s32 %s25, 2
      %s32 = sadd.s32 %s25, 1
      %s33 = ssub.s32 %s25, %s32
      %p34 = scmp.eq.s32.totalorder %s33, 0
      %s36 = sadd.s32 %s35, 1
      %s37 = scalar_select %p34, %s35, %s36
      %p40 = pneg %p34
      %p41 = scmp.eq.s32.totalorder %s25, 1
      %p42 = por %p40, %p41
      %p43 = scmp.ne.s32.totalorder %s35, %s38
      %p44 = scmp.eq.s32.totalorder %s25, 0
      %p45 = por %p43, %p44
      %p46 = scmp.ne.s32.totalorder %s35, %s38
      %p47 = scmp.eq.s32.totalorder %s30, 1
      %p48 = por %p46, %p47
      %p49 = scmp.ne.s32.totalorder %s38, %s39
      %p50 = scmp.eq.s32.totalorder %s30, 0
      %p51 = por %p49, %p50
      %p52 = scmp.ne.s32.totalorder %s38, %s39
      %p53 = scmp.eq.s32.totalorder %s31, 1
      %p54 = por %p52, %p53
      %p56 = scmp.ne.s32.totalorder %s39, %s55
      %p57 = scmp.eq.s32.totalorder %s31, 0
      %p58 = por %p56, %p57
      %s60 = sadd.s32 %s59, 1
      %p63 = scmp.eq.s32.totalorder %s25, 1
      %p64 = scmp.ne.s32.totalorder %s59, %s61
      %p65 = scmp.eq.s32.totalorder %s25, 0
      %p66 = por %p64, %p65
      %p67 = scmp.ne.s32.totalorder %s59, %s61
      %p68 = scmp.eq.s32.totalorder %s30, 1
      %p69 = por %p67, %p68
      %p70 = scmp.ne.s32.totalorder %s61, %s62
      %p71 = scmp.eq.s32.totalorder %s30, 0
      %p72 = por %p70, %p71
      %p73 = scmp.ne.s32.totalorder %s61, %s62
      %p74 = scmp.eq.s32.totalorder %s31, 1
      %p75 = por %p73, %p74
      %p77 = scmp.ne.s32.totalorder %s62, %s76
      %p78 = scmp.eq.s32.totalorder %s31, 0
      %p79 = por %p77, %p78
      %s81 = sadd.s32 %s80, 1
      %p84 = scmp.eq.s32.totalorder %s25, 1
      %p85 = scmp.ne.s32.totalorder %s80, %s82
      %p86 = scmp.eq.s32.totalorder %s25, 0
      %p87 = por %p85, %p86
      %p88 = scmp.ne.s32.totalorder %s80, %s82
      %p89 = scmp.eq.s32.totalorder %s30, 1
      %p90 = por %p88, %p89
      %p91 = scmp.ne.s32.totalorder %s82, %s83
      %p92 = scmp.eq.s32.totalorder %s30, 0
      %p93 = por %p91, %p92
      %p94 = scmp.ne.s32.totalorder %s82, %s83
      %p95 = scmp.eq.s32.totalorder %s31, 1
      %p96 = por %p94, %p95
      %p98 = scmp.ne.s32.totalorder %s83, %s97
      %p99 = scmp.eq.s32.totalorder %s31, 0
      %p100 = por %p98, %p99
      %s102 = sadd.s32 %s101, 1
      %p105 = scmp.eq.s32.totalorder %s25, 1
      %p106 = scmp.ne.s32.totalorder %s101, %s103
      %p107 = scmp.eq.s32.totalorder %s25, 0
      %p108 = por %p106, %p107
      %p109 = scmp.ne.s32.totalorder %s101, %s103
      %p110 = scmp.eq.s32.totalorder %s30, 1
      %p111 = por %p109, %p110
      %p112 = scmp.ne.s32.totalorder %s103, %s104
      %p113 = scmp.eq.s32.totalorder %s30, 0
      %p114 = por %p112, %p113
      %p115 = scmp.ne.s32.totalorder %s103, %s104
      %p116 = scmp.eq.s32.totalorder %s31, 1
      %p117 = por %p115, %p116
      %p119 = scmp.ne.s32.totalorder %s104, %s118
      %p120 = scmp.eq.s32.totalorder %s31, 0
      %p121 = por %p119, %p120
      %s123 = sadd.s32 %s122, 1
      %p126 = scmp.eq.s32.totalorder %s25, 1
      %p127 = scmp.ne.s32.totalorder %s122, %s124
      %p128 = scmp.eq.s32.totalorder %s25, 0
      %p129 = por %p127, %p128
      %p130 = scmp.ne.s32.totalorder %s122, %s124
      %p131 = scmp.eq.s32.totalorder %s30, 1
      %p132 = por %p130, %p131
      %p133 = scmp.ne.s32.totalorder %s124, %s125
      %p134 = scmp.eq.s32.totalorder %s30, 0
      %p135 = por %p133, %p134
      %p136 = scmp.ne.s32.totalorder %s124, %s125
      %p137 = scmp.eq.s32.totalorder %s31, 1
      %p138 = por %p136, %p137
      %p140 = scmp.ne.s32.totalorder %s125, %s139
      %p141 = scmp.eq.s32.totalorder %s31, 0
      %p142 = por %p140, %p141
      %s144 = sadd.s32 %s143, 1
      %p147 = scmp.eq.s32.totalorder %s25, 1
      %p148 = scmp.ne.s32.totalorder %s143, %s145
      %p149 = scmp.eq.s32.totalorder %s25, 0
      %p150 = por %p148, %p149
      %p151 = scmp.ne.s32.totalorder %s143, %s145
      %p152 = scmp.eq.s32.totalorder %s30, 1
      %p153 = por %p151, %p152
      %p154 = scmp.ne.s32.totalorder %s145, %s146
      %p155 = scmp.eq.s32.totalorder %s30, 0
      %p156 = por %p154, %p155
      %p157 = scmp.ne.s32.totalorder %s145, %s146
      %p158 = scmp.eq.s32.totalorder %s31, 1
      %p159 = por %p157, %p158
      %p161 = scmp.ne.s32.totalorder %s146, %s160
      %p162 = scmp.eq.s32.totalorder %s31, 0
      %p163 = por %p161, %p162
      %s165 = sadd.s32 %s164, 1
      %p168 = scmp.eq.s32.totalorder %s25, 1
      %p169 = scmp.ne.s32.totalorder %s164, %s166
      %p170 = scmp.eq.s32.totalorder %s25, 0
      %p171 = por %p169, %p170
      %p172 = scmp.ne.s32.totalorder %s164, %s166
      %p173 = scmp.eq.s32.totalorder %s30, 1
      %p174 = por %p172, %p173
      %p175 = scmp.ne.s32.totalorder %s166, %s167
      %p176 = scmp.eq.s32.totalorder %s30, 0
      %p177 = por %p175, %p176
      %p178 = scmp.ne.s32.totalorder %s166, %s167
      %p179 = scmp.eq.s32.totalorder %s31, 1
      %p180 = por %p178, %p179
      %p182 = scmp.ne.s32.totalorder %s167, %s181
      %p183 = scmp.eq.s32.totalorder %s31, 0
      %p184 = por %p182, %p183
      %s186 = sadd.s32 %s185, 1
      %p189 = scmp.eq.s32.totalorder %s25, 1
      %p190 = scmp.ne.s32.totalorder %s185, %s187
      %p191 = scmp.eq.s32.totalorder %s25, 0
      %p192 = por %p190, %p191
      %p193 = scmp.ne.s32.totalorder %s185, %s187
      %p194 = scmp.eq.s32.totalorder %s30, 1
      %p195 = por %p193, %p194
      %p196 = scmp.ne.s32.totalorder %s187, %s188
      %p197 = scmp.eq.s32.totalorder %s30, 0
      %p198 = por %p196, %p197
      %p199 = scmp.ne.s32.totalorder %s187, %s188
      %p200 = scmp.eq.s32.totalorder %s31, 1
      %p201 = por %p199, %p200
      %p203 = scmp.ne.s32.totalorder %s188, %s202
      %p204 = scmp.eq.s32.totalorder %s31, 0
      %p205 = por %p203, %p204
      %s207 = sadd.s32 %s206, 1
      %p210 = scmp.eq.s32.totalorder %s25, 1
      %p211 = scmp.ne.s32.totalorder %s206, %s208
      %p212 = scmp.eq.s32.totalorder %s25, 0
      %p213 = por %p211, %p212
      %p214 = scmp.ne.s32.totalorder %s206, %s208
      %p215 = scmp.eq.s32.totalorder %s30, 1
      %p216 = por %p214, %p215
      %p217 = scmp.ne.s32.totalorder %s208, %s209
      %p218 = scmp.eq.s32.totalorder %s30, 0
      %p219 = por %p217, %p218
      %p220 = scmp.ne.s32.totalorder %s208, %s209
      %p221 = scmp.eq.s32.totalorder %s31, 1
      %p222 = por %p220, %p221
      %p224 = scmp.ne.s32.totalorder %s209, %s223
      %p225 = scmp.eq.s32.totalorder %s31, 0
      %p226 = por %p224, %p225
      %s228 = sadd.s32 %s227, 1
      %p231 = scmp.eq.s32.totalorder %s25, 1
      %p232 = scmp.ne.s32.totalorder %s227, %s229
      %p233 = scmp.eq.s32.totalorder %s25, 0
      %p234 = por %p232, %p233
      %p235 = scmp.ne.s32.totalorder %s227, %s229
      %p236 = scmp.eq.s32.totalorder %s30, 1
      %p237 = por %p235, %p236
      %p238 = scmp.ne.s32.totalorder %s229, %s230
      %p239 = scmp.eq.s32.totalorder %s30, 0
      %p240 = por %p238, %p239
      %p241 = scmp.ne.s32.totalorder %s229, %s230
      %p242 = scmp.eq.s32.totalorder %s31, 1
      %p243 = por %p241, %p242
      %p245 = scmp.ne.s32.totalorder %s230, %s244
      %p246 = scmp.eq.s32.totalorder %s31, 0
      %p247 = por %p245, %p246
      %s249 = sadd.s32 %s248, 1
      %p252 = scmp.eq.s32.totalorder %s25, 1
      %p253 = scmp.ne.s32.totalorder %s248, %s250
      %p254 = scmp.eq.s32.totalorder %s25, 0
      %p255 = por %p253, %p254
      %p256 = scmp.ne.s32.totalorder %s248, %s250
      %p257 = scmp.eq.s32.totalorder %s30, 1
      %p258 = por %p256, %p257
      %p259 = scmp.ne.s32.totalorder %s250, %s251
      %p260 = scmp.eq.s32.totalorder %s30, 0
      %p261 = por %p259, %p260
      %p262 = scmp.ne.s32.totalorder %s250, %s251
      %p263 = scmp.eq.s32.totalorder %s31, 1
      %p264 = por %p262, %p263
      %p266 = scmp.ne.s32.totalorder %s251, %s265
      %p267 = scmp.eq.s32.totalorder %s31, 0
      %p268 = por %p266, %p267
      %s269 = ssub.s32 %s25, %s32
      %p270 = scmp.eq.s32.totalorder %s269, 0
      %s272 = sadd.s32 %s271, 1
      %s273 = scalar_select %p270, %s271, %s272
      %p276 = pneg %p270
      %p277 = scmp.eq.s32.totalorder %s25, 1
      %p278 = por %p276, %p277
      %p279 = scmp.ne.s32.totalorder %s271, %s274
      %p280 = scmp.eq.s32.totalorder %s25, 0
      %p281 = por %p279, %p280
      %p282 = scmp.ne.s32.totalorder %s271, %s274
      %p283 = scmp.eq.s32.totalorder %s30, 1
      %p284 = por %p282, %p283
      %p285 = scmp.ne.s32.totalorder %s274, %s275
      %p286 = scmp.eq.s32.totalorder %s30, 0
      %p287 = por %p285, %p286
      %p288 = scmp.ne.s32.totalorder %s274, %s275
      %p289 = scmp.eq.s32.totalorder %s31, 1
      %p290 = por %p288, %p289
      %p292 = scmp.ne.s32.totalorder %s275, %s291
      %p293 = scmp.eq.s32.totalorder %s31, 0
      %p294 = por %p292, %p293
      %p295 = scmp.le.s32.totalorder 1, %s25
      %p296 = scmp.lt.s32.totalorder %s25, 3
      %p297 = pnand %p295, %p296
      %p298 = pneg %p297
      // Predicated region
      $region9: #{tpu_custom_call.1} parent=5 // pred_check
        _
      $region10: #{tpu_custom_call.1} parent=5 // pred_check_branch
        %300 = sbr.rel (%p297) target = $region12
      $region11: #{tpu_custom_call.1} parent=5 // pred_region
        %s301 = ssub.s32 %s25, 1
        // Predicated region
        $region13: #{tpu_custom_call.1} parent=11 // pred_check
          %p302 = pneg %p72
        $region14: #{tpu_custom_call.1} parent=11 // pred_check_branch
          %304 = sbr.rel (%p302) target = $region16
        $region15: #{tpu_custom_call.1} parent=11 // pred_region
          %s306 = ssub.s32 64, 64
          %307 = vsyncadd [#allocation7], %s306
          %s309 = sshll.u32 [#allocation6], 4
          %s310 = int_to_ptr.vmem [resolvable:$true] %s309
          %312 = dma.hbm_to_vmem [thread:$0]  %s1, 64, %s310, [#allocation7]
        $region16: #{tpu_custom_call.1} parent=11 // pred_fallthru
          _
        // Predicated region
        $region17: #{tpu_custom_call.1} parent=11 // pred_check
          %p313 = pneg %p93
        $region18: #{tpu_custom_call.1} parent=11 // pred_check_branch
          %315 = sbr.rel (%p313) target = $region20
        $region19: #{tpu_custom_call.1} parent=11 // pred_region
          _
        $region20: #{tpu_custom_call.1} parent=11 // pred_fallthru
          _
        // Predicated region
        $region21: #{tpu_custom_call.1} parent=11 // pred_check
          %p316 = pneg %p114
        $region22: #{tpu_custom_call.1} parent=11 // pred_check_branch
          %318 = sbr.rel (%p316) target = $region24
        $region23: #{tpu_custom_call.1} parent=11 // pred_region
          _
        $region24: #{tpu_custom_call.1} parent=11 // pred_fallthru
          _
        // Predicated region
        $region25: #{tpu_custom_call.1} parent=11 // pred_check
          %p319 = pneg %p135
        $region26: #{tpu_custom_call.1} parent=11 // pred_check_branch
          %321 = sbr.rel (%p319) target = $region28
        $region27: #{tpu_custom_call.1} parent=11 // pred_region
          _
        $region28: #{tpu_custom_call.1} parent=11 // pred_fallthru
          _
        // Predicated region
        $region29: #{tpu_custom_call.1} parent=11 // pred_check
          %p322 = pneg %p156
        $region30: #{tpu_custom_call.1} parent=11 // pred_check_branch
          %324 = sbr.rel (%p322) target = $region32
        $region31: #{tpu_custom_call.1} parent=11 // pred_region
          _
        $region32: #{tpu_custom_call.1} parent=11 // pred_fallthru
          _
        // Predicated region
        $region33: #{tpu_custom_call.1} parent=11 // pred_check
          %p325 = pneg %p177
        $region34: #{tpu_custom_call.1} parent=11 // pred_check_branch
          %327 = sbr.rel (%p325) target = $region36
        $region35: #{tpu_custom_call.1} parent=11 // pred_region
          _
        $region36: #{tpu_custom_call.1} parent=11 // pred_fallthru
          _
        // Predicated region
        $region37: #{tpu_custom_call.1} parent=11 // pred_check
          %p328 = pneg %p198
        $region38: #{tpu_custom_call.1} parent=11 // pred_check_branch
          %330 = sbr.rel (%p328) target = $region40
        $region39: #{tpu_custom_call.1} parent=11 // pred_region
          _
        $region40: #{tpu_custom_call.1} parent=11 // pred_fallthru
          _
        // Predicated region
        $region41: #{tpu_custom_call.1} parent=11 // pred_check
          %p331 = pneg %p219
        $region42: #{tpu_custom_call.1} parent=11 // pred_check_branch
          %333 = sbr.rel (%p331) target = $region44
        $region43: #{tpu_custom_call.1} parent=11 // pred_region
          _
        $region44: #{tpu_custom_call.1} parent=11 // pred_fallthru
          _
        // Predicated region
        $region45: #{tpu_custom_call.1} parent=11 // pred_check
          %p334 = pneg %p240
        $region46: #{tpu_custom_call.1} parent=11 // pred_check_branch
          %336 = sbr.rel (%p334) target = $region48
        $region47: #{tpu_custom_call.1} parent=11 // pred_region
          _
        $region48: #{tpu_custom_call.1} parent=11 // pred_fallthru
          _
        // Predicated region
        $region49: #{tpu_custom_call.1} parent=11 // pred_check
          %p337 = pneg %p261
        $region50: #{tpu_custom_call.1} parent=11 // pred_check_branch
          %339 = sbr.rel (%p337) target = $region52
        $region51: #{tpu_custom_call.1} parent=11 // pred_region
          %s341 = ssub.s32 16, 16
          %342 = vsyncadd [#allocation5], %s341
          %s344 = sshll.u32 %s10, 4
          %s345 = int_to_ptr.vmem [resolvable:$true] %s344
          %347 = dma.vmem_to_smem %s345, 16, [#allocation8], [#allocation5]
        $region52: #{tpu_custom_call.1} parent=11 // pred_fallthru
          _
      $region12: #{tpu_custom_call.1} parent=5 // pred_fallthru
        _
      %p348 = scmp.lt.s32.totalorder %s25, 2
      // Predicated region
      $region53: #{tpu_custom_call.1} parent=5 // pred_check
        %p349 = pneg %p348
      $region54: #{tpu_custom_call.1} parent=5 // pred_check_branch
        %351 = sbr.rel (%p349) target = $region56
      $region55: #{tpu_custom_call.1} parent=5 // pred_region
        // Predicated region
        $region57: #{tpu_custom_call.1} parent=55 // pred_check
          %p352 = pneg %p45
        $region58: #{tpu_custom_call.1} parent=55 // pred_check_branch
          %354 = sbr.rel (%p352) target = $region60
        $region59: #{tpu_custom_call.1} parent=55 // pred_region
          %s355 = sand.u32 %s35, 1
          %s356 = scalar_lea.sflag [#allocation3], %s355
          %s357 = sand.u32 %s35, 1
          %s358 = smul.addr %s357, 32
          %s359 = scalar_lea.vmem [#allocation2], %s358
          %s361 = ssub.s32 512, 512
          %362 = vsyncadd %s356, %s361
          %s363 = smul.addr %s25, 4
          %s364 = smul.addr %s363, 128
          %s365 = scalar_lea.hbm %s0, %s364
          %s367 = sshll.u32 %s359, 4
          %s368 = int_to_ptr.vmem [resolvable:$true] %s367
          %370 = dma.hbm_to_vmem [thread:$0]  %s365, 512, %s368, %s356
        $region60: #{tpu_custom_call.1} parent=55 // pred_fallthru
          _
      $region56: #{tpu_custom_call.1} parent=5 // pred_fallthru
        _
      %p371 = scmp.le.s32.totalorder 1, %s25
      %p372 = scmp.lt.s32.totalorder %s25, 3
      %p373 = pnand %p371, %p372
      %p374 = pneg %p373
      // Predicated region
      $region61: #{tpu_custom_call.1} parent=5 // pred_check
        _
      $region62: #{tpu_custom_call.1} parent=5 // pred_check_branch
        %376 = sbr.rel (%p373) target = $region64
      $region63: #{tpu_custom_call.1} parent=5 // pred_region
        %s377 = ssub.s32 %s25, 1
        %s378 = sand.u32 %s38, 1
        %s379 = scalar_lea.sflag [#allocation3], %s378
        %s380 = sand.u32 %s38, 1
        %s381 = smul.addr %s380, 32
        %s382 = scalar_lea.vmem [#allocation2], %s381
        // Predicated region
        $region65: #{tpu_custom_call.1} parent=63 // pred_check
          %p383 = pneg %p51
        $region66: #{tpu_custom_call.1} parent=63 // pred_check_branch
          %385 = sbr.rel (%p383) target = $region68
        $region67: #{tpu_custom_call.1} parent=63 // pred_region
          %386 = dma.done %s379, 512
        $region68: #{tpu_custom_call.1} parent=63 // pred_fallthru
          _
        // Predicated region
        $region69: #{tpu_custom_call.1} parent=63 // pred_check
          %p387 = pneg %p72
        $region70: #{tpu_custom_call.1} parent=63 // pred_check_branch
          %389 = sbr.rel (%p387) target = $region72
        $region71: #{tpu_custom_call.1} parent=63 // pred_region
          %390 = dma.done [#allocation7], 64
        $region72: #{tpu_custom_call.1} parent=63 // pred_fallthru
          _
        // Predicated region
        $region73: #{tpu_custom_call.1} parent=63 // pred_check
          %p391 = pneg %p261
        $region74: #{tpu_custom_call.1} parent=63 // pred_check_branch
          %393 = sbr.rel (%p391) target = $region76
        $region75: #{tpu_custom_call.1} parent=63 // pred_region
          %394 = dma.done [#allocation5], 16
        $region76: #{tpu_custom_call.1} parent=63 // pred_fallthru
          _
        %395 = sfence
        %s396 = sand.u32 %s38, 1
        %s397 = scalar_lea.sflag [#allocation3], %s396
        %s398 = sand.u32 %s38, 1
        %s399 = smul.addr %s398, 32
        %s400 = scalar_lea.vmem [#allocation2], %s399
        %p401 = pneg %p51
        %p402 = pneg %p48
        %p403 = pneg %p72
        %p404 = pneg %p69
        %p405 = pneg %p93
        %p406 = pneg %p90
        %p407 = pneg %p114
        %p408 = pneg %p111
        %p409 = pneg %p135
        %p410 = pneg %p132
        %p411 = pneg %p156
        %p412 = pneg %p153
        %p413 = pneg %p177
        %p414 = pneg %p174
        %p415 = pneg %p198
        %p416 = pneg %p195
        %p417 = pneg %p219
        %p418 = pneg %p216
        %p419 = pneg %p240
        %p420 = pneg %p237
        %p421 = pneg %p261
        %p422 = pneg %p258
        %p423 = pneg %p287
        %p424 = pneg %p284
        %s425 = sand.u32 %s274, 1
        %s426 = scalar_lea.sflag [#allocation4], %s425
        %s427 = sand.u32 %s274, 1
        %s428 = smul.addr %s427, 24
        %s429 = scalar_lea.vmem [#allocation9], %s428
        %v430 = vld [vmem:[%s382] sm:$0xff]
        %v431 = vld [vmem:[%s382 + $0x8] sm:$0xff]
        %v432 = vld [vmem:[%s382 + $0x10] sm:$0xff]
        %v433 = vld [vmem:[%s382 + $0x18] sm:$0xff]
        %v434 = vld [vmem:[#allocation6] sm:$0xf]
        %439 = vrot.lane.b32.xlu0 %v430, 127
        %v440 = vpop.permute.xlu0 %439
        %441 = vrot.lane.b32.xlu0 %v431, 127
        %v442 = vpop.permute.xlu0 %441
        %443 = vrot.lane.b32.xlu0 %v432, 127
        %v444 = vpop.permute.xlu0 %443
        %445 = vrot.lane.b32.xlu0 %v433, 127
        %v446 = vpop.permute.xlu0 %445
        %vm447 = vcmask 1039360
        %v448 = vsel %vm447, %v440, %v442
        %v449 = vsel %vm447, %v442, %v444
        %v450 = vsel %vm447, %v444, %v446
        %455 = vrot.lane.b32.xlu0 %v430, 126
        %v456 = vpop.permute.xlu0 %455
        %457 = vrot.lane.b32.xlu0 %v431, 126
        %v458 = vpop.permute.xlu0 %457
        %459 = vrot.lane.b32.xlu0 %v432, 126
        %v460 = vpop.permute.xlu0 %459
        %461 = vrot.lane.b32.xlu0 %v433, 126
        %v462 = vpop.permute.xlu0 %461
        %vm463 = vcmask 1031168
        %v464 = vsel %vm463, %v456, %v458
        %v465 = vsel %vm463, %v458, %v460
        %v466 = vsel %vm463, %v460, %v462
        %471 = vrot.lane.b32.xlu0 %v430, 110
        %v472 = vpop.permute.xlu0 %471
        %473 = vrot.lane.b32.xlu0 %v431, 110
        %v474 = vpop.permute.xlu0 %473
        %475 = vrot.lane.b32.xlu0 %v432, 110
        %v476 = vpop.permute.xlu0 %475
        %477 = vrot.lane.b32.xlu0 %v433, 110
        %v478 = vpop.permute.xlu0 %477
        %vm479 = vcmask 900096
        %v480 = vsel %vm479, %v472, %v474
        %v481 = vsel %vm479, %v474, %v476
        %v482 = vsel %vm479, %v476, %v478
        %487 = vrot.lane.b32.xlu0 %v430, 109
        %v488 = vpop.permute.xlu0 %487
        %489 = vrot.lane.b32.xlu0 %v431, 109
        %v490 = vpop.permute.xlu0 %489
        %491 = vrot.lane.b32.xlu0 %v432, 109
        %v492 = vpop.permute.xlu0 %491
        %493 = vrot.lane.b32.xlu0 %v433, 109
        %v494 = vpop.permute.xlu0 %493
        %vm495 = vcmask 891904
        %v496 = vsel %vm495, %v488, %v490
        %v497 = vsel %vm495, %v490, %v492
        %v498 = vsel %vm495, %v492, %v494
        %503 = vrot.lane.b32.xlu0 %v430, 108
        %v504 = vpop.permute.xlu0 %503
        %505 = vrot.lane.b32.xlu0 %v431, 108
        %v506 = vpop.permute.xlu0 %505
        %507 = vrot.lane.b32.xlu0 %v432, 108
        %v508 = vpop.permute.xlu0 %507
        %509 = vrot.lane.b32.xlu0 %v433, 108
        %v510 = vpop.permute.xlu0 %509
        %vm511 = vcmask 883712
        %v512 = vsel %vm511, %v504, %v506
        %v513 = vsel %vm511, %v506, %v508
        %v514 = vsel %vm511, %v508, %v510
        %519 = vrot.lane.b32.xlu0 %v430, 92
        %v520 = vpop.permute.xlu0 %519
        %521 = vrot.lane.b32.xlu0 %v431, 92
        %v522 = vpop.permute.xlu0 %521
        %523 = vrot.lane.b32.xlu0 %v432, 92
        %v524 = vpop.permute.xlu0 %523
        %525 = vrot.lane.b32.xlu0 %v433, 92
        %v526 = vpop.permute.xlu0 %525
        %vm527 = vcmask 752640
        %v528 = vsel %vm527, %v520, %v522
        %v529 = vsel %vm527, %v522, %v524
        %v530 = vsel %vm527, %v524, %v526
        %535 = vrot.lane.b32.xlu0 %v430, 91
        %v536 = vpop.permute.xlu0 %535
        %537 = vrot.lane.b32.xlu0 %v431, 91
        %v538 = vpop.permute.xlu0 %537
        %539 = vrot.lane.b32.xlu0 %v432, 91
        %v540 = vpop.permute.xlu0 %539
        %541 = vrot.lane.b32.xlu0 %v433, 91
        %v542 = vpop.permute.xlu0 %541
        %vm543 = vcmask 744448
        %v544 = vsel %vm543, %v536, %v538
        %v545 = vsel %vm543, %v538, %v540
        %v546 = vsel %vm543, %v540, %v542
        %551 = vrot.lane.b32.xlu0 %v430, 90
        %v552 = vpop.permute.xlu0 %551
        %553 = vrot.lane.b32.xlu0 %v431, 90
        %v554 = vpop.permute.xlu0 %553
        %555 = vrot.lane.b32.xlu0 %v432, 90
        %v556 = vpop.permute.xlu0 %555
        %557 = vrot.lane.b32.xlu0 %v433, 90
        %v558 = vpop.permute.xlu0 %557
        %vm559 = vcmask 736256
        %v560 = vsel %vm559, %v552, %v554
        %v561 = vsel %vm559, %v554, %v556
        %v562 = vsel %vm559, %v556, %v558
        %v567 = vld [vmem:[%s2] sm:$0xff]
        %v568 = vld [vmem:[%s3] sm:$0xff]
        %570 = vset.pattern.permute.xlu0 0
        %571 = vperm.xlu0 %570, %v568
        %v572 = vpop.permute.xlu0 %571
        %vm574 = vcmask 588800
        %v576 = vsel %vm574, %v567, 0
        %578 = vmatprep.subr.mxu0 %v431
        %579 = vmatpush1.msra.mxu0 %v430
        %580 = vmatprep.subr.mxu0 %v449
        %581 = vmatpush1.msra.mxu0 %v448
        %582 = vmatprep.subr.mxu0 %v465
        %583 = vmatpush1.msra.mxu0 %v464
        %584 = vmatprep.subr.mxu0 %v481
        %585 = vmatpush1.msra.mxu0 %v480
        %586 = vmatprep.subr.mxu0 %v497
        %587 = vmatpush1.msra.mxu0 %v496
        %588 = vmatprep.subr.mxu0 %v513
        %589 = vmatpush1.msra.mxu0 %v512
        %590 = vmatprep.subr.mxu0 %v529
        %591 = vmatpush1.msra.mxu0 %v528
        %592 = vmatprep.subr.mxu0 %v545
        %593 = vmatpush1.msra.mxu0 %v544
        %594 = vmatprep.subr.mxu0 %v561
        %595 = vmatpush1.msra.mxu0 %v560
        %596 = vmatprep.subr.mxu0 0.0
        %597 = vmatpush1.msra.mxu0 0.0
        %598 = vmatprep.subr.mxu0 0.0
        %599 = vmatpush1.msra.mxu0 0.0
        %600 = vmatprep.subr.mxu0 0.0
        %601 = vmatpush1.msra.mxu0 0.0
        %602 = vmatprep.subr.mxu0 0.0
        %603 = vmatpush1.msra.mxu0 0.0
        %604 = vmatprep.subr.mxu0 0.0
        %605 = vmatpush1.msra.mxu0 0.0
        %606 = vmatprep.subr.mxu0 0.0
        %607 = vmatpush1.msra.mxu0 0.0
        %608 = vmatprep.subr.mxu0 0.0
        %609 = vmatpush1.msra.mxu0 0.0
        %610 = vmatprep.subr.mxu0 0.0
        %611 = vmatpush1.msra.mxu0 0.0
        %612 = vmatprep.subr.mxu0 0.0
        %613 = vmatpush1.msra.mxu0 0.0
        %614 = vmatprep.subr.mxu0 0.0
        %615 = vmatpush1.msra.mxu0 0.0
        %616 = vmatprep.subr.mxu0 0.0
        %617 = vmatpush1.msra.mxu0 0.0
        %618 = vmatprep.subr.mxu0 0.0
        %619 = vmatpush1.msra.mxu0 0.0
        %620 = vmatprep.subr.mxu0 0.0
        %621 = vmatpush1.msra.mxu0 0.0
        %622 = vmatprep.subr.mxu0 0.0
        %623 = vmatpush1.msra.mxu0 0.0
        %624 = vmatprep.subr.mxu0 0.0
        %625 = vmatpush1.msra.mxu0 0.0
        %626 = vmatprep.subr.mxu0 0.0
        %627 = vmatpush1.msra.mxu0 0.0
        %628 = vmatprep.subr.mxu0 0.0
        %629 = vmatpush1.msra.mxu0 0.0
        %630 = vmatprep.subr.mxu0 0.0
        %631 = vmatpush1.msra.mxu0 0.0
        %632 = vmatprep.subr.mxu0 0.0
        %633 = vmatpush1.msra.mxu0 0.0
        %634 = vmatprep.subr.mxu0 0.0
        %635 = vmatpush1.msra.mxu0 0.0
        %636 = vmatprep.subr.mxu0 0.0
        %637 = vmatpush1.msra.mxu0 0.0
        %638 = vmatprep.subr.mxu0 0.0
        %639 = vmatpush1.msra.mxu0 0.0
        %640 = vmatprep.subr.mxu0 0.0
        %641 = vmatpush1.msra.mxu0 0.0
        %642 = vmatprep.mubr.f32.mxu0 0.0
        %643 = vmatmul.mubr.f32.gmra.mrb[0].mxu0 %v576
        %v644 = vpop.f32.mrb[0].mxu0
        %v645 = vadd.f32 %v572, %v644
        %v646 = vpop.f32.mrb[0].mxu0
        %v647 = vadd.f32 %v572, %v646
        %648 = vdwg.mxu0
        %649 = vmatprep.subr.mxu0 %v433
        %650 = vmatpush1.msra.mxu0 %v432
        %651 = vmatprep.subr.mxu0 %v446
        %652 = vmatpush1.msra.mxu0 %v450
        %653 = vmatprep.subr.mxu0 %v462
        %654 = vmatpush1.msra.mxu0 %v466
        %655 = vmatprep.subr.mxu0 %v478
        %656 = vmatpush1.msra.mxu0 %v482
        %657 = vmatprep.subr.mxu0 %v494
        %658 = vmatpush1.msra.mxu0 %v498
        %659 = vmatprep.subr.mxu0 %v510
        %660 = vmatpush1.msra.mxu0 %v514
        %661 = vmatprep.subr.mxu0 %v526
        %662 = vmatpush1.msra.mxu0 %v530
        %663 = vmatprep.subr.mxu0 %v542
        %664 = vmatpush1.msra.mxu0 %v546
        %665 = vmatprep.subr.mxu0 %v558
        %666 = vmatpush1.msra.mxu0 %v562
        %667 = vmatprep.subr.mxu0 0.0
        %668 = vmatpush1.msra.mxu0 0.0
        %669 = vmatprep.subr.mxu0 0.0
        %670 = vmatpush1.msra.mxu0 0.0
        %671 = vmatprep.subr.mxu0 0.0
        %672 = vmatpush1.msra.mxu0 0.0
        %673 = vmatprep.subr.mxu0 0.0
        %674 = vmatpush1.msra.mxu0 0.0
        %675 = vmatprep.subr.mxu0 0.0
        %676 = vmatpush1.msra.mxu0 0.0
        %677 = vmatprep.subr.mxu0 0.0
        %678 = vmatpush1.msra.mxu0 0.0
        %679 = vmatprep.subr.mxu0 0.0
        %680 = vmatpush1.msra.mxu0 0.0
        %681 = vmatprep.subr.mxu0 0.0
        %682 = vmatpush1.msra.mxu0 0.0
        %683 = vmatprep.subr.mxu0 0.0
        %684 = vmatpush1.msra.mxu0 0.0
        %685 = vmatprep.subr.mxu0 0.0
        %686 = vmatpush1.msra.mxu0 0.0
        %687 = vmatprep.subr.mxu0 0.0
        %688 = vmatpush1.msra.mxu0 0.0
        %689 = vmatprep.subr.mxu0 0.0
        %690 = vmatpush1.msra.mxu0 0.0
        %691 = vmatprep.subr.mxu0 0.0
        %692 = vmatpush1.msra.mxu0 0.0
        %693 = vmatprep.subr.mxu0 0.0
        %694 = vmatpush1.msra.mxu0 0.0
        %695 = vmatprep.subr.mxu0 0.0
        %696 = vmatpush1.msra.mxu0 0.0
        %697 = vmatprep.subr.mxu0 0.0
        %698 = vmatpush1.msra.mxu0 0.0
        %699 = vmatprep.subr.mxu0 0.0
        %700 = vmatpush1.msra.mxu0 0.0
        %701 = vmatprep.subr.mxu0 0.0
        %702 = vmatpush1.msra.mxu0 0.0
        %703 = vmatprep.subr.mxu0 0.0
        %704 = vmatpush1.msra.mxu0 0.0
        %705 = vmatprep.subr.mxu0 0.0
        %706 = vmatpush1.msra.mxu0 0.0
        %707 = vmatprep.subr.mxu0 0.0
        %708 = vmatpush1.msra.mxu0 0.0
        %709 = vmatprep.subr.mxu0 0.0
        %710 = vmatpush1.msra.mxu0 0.0
        %711 = vmatprep.subr.mxu0 0.0
        %712 = vmatpush1.msra.mxu0 0.0
        %713 = vmatprep.mubr.f32.mxu0 0.0
        %714 = vmatmul.mubr.f32.gmra.mrb[0].mxu0 %v576
        %v715 = vpop.f32.mrb[0].mxu0
        %v716 = vadd.f32 %v572, %v715
        %v717 = vpop.f32.mrb[0].mxu0
        %v718 = vadd.f32 %v572, %v717
        %719 = vdwg.mxu0
        %s720 = sld [smem:[#allocation8]]
        %vm721 = vcmp.ge.f32.partialorder %v645, 0.0
        %vm722 = vcmp.ge.f32.partialorder %v647, 0.0
        %vm723 = vcmp.ge.f32.partialorder %v716, 0.0
        %vm724 = vcmp.ge.f32.partialorder %v718, 0.0
        %v725 = vstv %s720
        %v726 = vmul.f32 %v725, %v645
        %v727 = vmul.f32 %v725, %v647
        %v728 = vmul.f32 %v725, %v716
        %v729 = vmul.f32 %v725, %v718
        %v730 = vsel %vm721, %v645, %v726
        %v731 = vsel %vm722, %v647, %v727
        %v732 = vsel %vm723, %v716, %v728
        %v733 = vsel %vm724, %v718, %v729
        %v735 = vlaneseq
        %v736 = vshrl.u32 %v735, 7
        %v737 = vsub.s32 0, %v736
        %v738 = vrot.slane %v434, %v737
        %v739 = vlaneseq
        %v740 = vshrl.u32 %v739, 7
        %v741 = vsub.s32 1, %v740
        %v742 = vrot.slane %v434, %v741
        %v743 = vlaneseq
        %v744 = vshrl.u32 %v743, 7
        %v745 = vsub.s32 2, %v744
        %v746 = vrot.slane %v434, %v745
        %v747 = vlaneseq
        %v748 = vshrl.u32 %v747, 7
        %v749 = vsub.s32 3, %v748
        %v750 = vrot.slane %v434, %v749
        %751 = vrot.lane.b32.xlu0 %v738, 109
        %v752 = vpop.permute.xlu0 %751
        %753 = vrot.lane.b32.xlu0 %v742, 109
        %v754 = vpop.permute.xlu0 %753
        %755 = vrot.lane.b32.xlu0 %v746, 109
        %v756 = vpop.permute.xlu0 %755
        %757 = vrot.lane.b32.xlu0 %v750, 109
        %v758 = vpop.permute.xlu0 %757
        %v759 = vsel %vm495, %v752, %v754
        %v760 = vsel %vm495, %v754, %v756
        %v761 = vsel %vm495, %v756, %v758
        %v766 = vmul.f32 %v730, %v759
        %v767 = vmul.f32 %v731, %v760
        %v768 = vmul.f32 %v732, %v761
        %v769 = vmul.f32 %v733, %v758
        %774 = vrot.lane.b32.xlu0 %v766, 19
        %v775 = vpop.permute.xlu0 %774
        %776 = vrot.lane.b32.xlu0 %v767, 19
        %v777 = vpop.permute.xlu0 %776
        %778 = vrot.lane.b32.xlu0 %v768, 19
        %v779 = vpop.permute.xlu0 %778
        %780 = vrot.lane.b32.xlu0 %v769, 19
        %v781 = vpop.permute.xlu0 %780
        %vm782 = vcmask 154624
        %v783 = vsel %vm782, %v775, %v777
        %v784 = vsel %vm782, %v777, %v779
        %v785 = vsel %vm782, %v779, %v781
        %786 = vrot.lane.b32.xlu0 %v766, 18
        %v787 = vpop.permute.xlu0 %786
        %788 = vrot.lane.b32.xlu0 %v767, 18
        %v789 = vpop.permute.xlu0 %788
        %790 = vrot.lane.b32.xlu0 %v768, 18
        %v791 = vpop.permute.xlu0 %790
        %792 = vrot.lane.b32.xlu0 %v769, 18
        %v793 = vpop.permute.xlu0 %792
        %vm794 = vcmask 146432
        %v795 = vsel %vm794, %v787, %v789
        %v796 = vsel %vm794, %v789, %v791
        %v797 = vsel %vm794, %v791, %v793
        %798 = vrot.lane.b32.xlu0 %v766, 17
        %v799 = vpop.permute.xlu0 %798
        %800 = vrot.lane.b32.xlu0 %v767, 17
        %v801 = vpop.permute.xlu0 %800
        %802 = vrot.lane.b32.xlu0 %v768, 17
        %v803 = vpop.permute.xlu0 %802
        %804 = vrot.lane.b32.xlu0 %v769, 17
        %v805 = vpop.permute.xlu0 %804
        %vm806 = vcmask 138240
        %v807 = vsel %vm806, %v799, %v801
        %v808 = vsel %vm806, %v801, %v803
        %v809 = vsel %vm806, %v803, %v805
        %810 = vrot.lane.b32.xlu0 %v766, 1
        %v811 = vpop.permute.xlu0 %810
        %812 = vrot.lane.b32.xlu0 %v767, 1
        %v813 = vpop.permute.xlu0 %812
        %814 = vrot.lane.b32.xlu0 %v768, 1
        %v815 = vpop.permute.xlu0 %814
        %816 = vrot.lane.b32.xlu0 %v769, 1
        %v817 = vpop.permute.xlu0 %816
        %vm818 = vcmask 7168
        %v819 = vsel %vm818, %v811, %v813
        %v820 = vsel %vm818, %v813, %v815
        %v821 = vsel %vm818, %v815, %v817
        %822 = vrot.lane.b32.xlu0 %v766, 127
        %v823 = vpop.permute.xlu0 %822
        %824 = vrot.lane.b32.xlu0 %v767, 127
        %v825 = vpop.permute.xlu0 %824
        %826 = vrot.lane.b32.xlu0 %v768, 127
        %v827 = vpop.permute.xlu0 %826
        %828 = vrot.lane.b32.xlu0 %v769, 127
        %v829 = vpop.permute.xlu0 %828
        %v830 = vsel %vm447, %v823, %v825
        %v831 = vsel %vm447, %v825, %v827
        %v832 = vsel %vm447, %v827, %v829
        %833 = vrot.lane.b32.xlu0 %v766, 111
        %v834 = vpop.permute.xlu0 %833
        %835 = vrot.lane.b32.xlu0 %v767, 111
        %v836 = vpop.permute.xlu0 %835
        %837 = vrot.lane.b32.xlu0 %v768, 111
        %v838 = vpop.permute.xlu0 %837
        %839 = vrot.lane.b32.xlu0 %v769, 111
        %v840 = vpop.permute.xlu0 %839
        %vm841 = vcmask 908288
        %v842 = vsel %vm841, %v834, %v836
        %v843 = vsel %vm841, %v836, %v838
        %v844 = vsel %vm841, %v838, %v840
        %845 = vrot.lane.b32.xlu0 %v766, 110
        %v846 = vpop.permute.xlu0 %845
        %847 = vrot.lane.b32.xlu0 %v767, 110
        %v848 = vpop.permute.xlu0 %847
        %849 = vrot.lane.b32.xlu0 %v768, 110
        %v850 = vpop.permute.xlu0 %849
        %851 = vrot.lane.b32.xlu0 %v769, 110
        %v852 = vpop.permute.xlu0 %851
        %853 = vrot.lane.b32.xlu0 %v830, 110
        %v854 = vpop.permute.xlu0 %853
        %855 = vrot.lane.b32.xlu0 %v831, 110
        %v856 = vpop.permute.xlu0 %855
        %857 = vrot.lane.b32.xlu0 %v832, 110
        %v858 = vpop.permute.xlu0 %857
        %859 = vrot.lane.b32.xlu0 %v829, 110
        %v860 = vpop.permute.xlu0 %859
        %v861 = vsel %vm479, %v846, %v848
        %v862 = vsel %vm479, %v848, %v850
        %v863 = vsel %vm479, %v850, %v852
        %v864 = vsel %vm479, %v854, %v856
        %v865 = vsel %vm479, %v856, %v858
        %v866 = vsel %vm479, %v858, %v860
        %v867 = vld [vmem:[%s4] sm:$0xff]
        %v868 = vld [vmem:[%s4 + $0x8] sm:$0xff]
        %v869 = vld [vmem:[%s5] sm:$0xff]
        %871 = vset.pattern.permute.xlu0 0
        %872 = vperm.xlu0 %871, %v869
        %v873 = vpop.permute.xlu0 %872
        %875 = vrot.lane.b32.xlu0 %v448, 109
        %v876 = vpop.permute.xlu0 %875
        %877 = vrot.lane.b32.xlu0 %v449, 109
        %v878 = vpop.permute.xlu0 %877
        %879 = vrot.lane.b32.xlu0 %v450, 109
        %v880 = vpop.permute.xlu0 %879
        %881 = vrot.lane.b32.xlu0 %v446, 109
        %v882 = vpop.permute.xlu0 %881
        %883 = vrot.lane.b32.xlu0 %v464, 109
        %v884 = vpop.permute.xlu0 %883
        %885 = vrot.lane.b32.xlu0 %v465, 109
        %v886 = vpop.permute.xlu0 %885
        %887 = vrot.lane.b32.xlu0 %v466, 109
        %v888 = vpop.permute.xlu0 %887
        %889 = vrot.lane.b32.xlu0 %v462, 109
        %v890 = vpop.permute.xlu0 %889
        %891 = vrot.lane.b32.xlu0 %v480, 109
        %v892 = vpop.permute.xlu0 %891
        %893 = vrot.lane.b32.xlu0 %v481, 109
        %v894 = vpop.permute.xlu0 %893
        %895 = vrot.lane.b32.xlu0 %v482, 109
        %v896 = vpop.permute.xlu0 %895
        %897 = vrot.lane.b32.xlu0 %v478, 109
        %v898 = vpop.permute.xlu0 %897
        %899 = vrot.lane.b32.xlu0 %v496, 109
        %v900 = vpop.permute.xlu0 %899
        %901 = vrot.lane.b32.xlu0 %v497, 109
        %v902 = vpop.permute.xlu0 %901
        %903 = vrot.lane.b32.xlu0 %v498, 109
        %v904 = vpop.permute.xlu0 %903
        %905 = vrot.lane.b32.xlu0 %v494, 109
        %v906 = vpop.permute.xlu0 %905
        %907 = vrot.lane.b32.xlu0 %v512, 109
        %v908 = vpop.permute.xlu0 %907
        %909 = vrot.lane.b32.xlu0 %v513, 109
        %v910 = vpop.permute.xlu0 %909
        %911 = vrot.lane.b32.xlu0 %v514, 109
        %v912 = vpop.permute.xlu0 %911
        %913 = vrot.lane.b32.xlu0 %v510, 109
        %v914 = vpop.permute.xlu0 %913
        %915 = vrot.lane.b32.xlu0 %v528, 109
        %v916 = vpop.permute.xlu0 %915
        %917 = vrot.lane.b32.xlu0 %v529, 109
        %v918 = vpop.permute.xlu0 %917
        %919 = vrot.lane.b32.xlu0 %v530, 109
        %v920 = vpop.permute.xlu0 %919
        %921 = vrot.lane.b32.xlu0 %v526, 109
        %v922 = vpop.permute.xlu0 %921
        %923 = vrot.lane.b32.xlu0 %v544, 109
        %v924 = vpop.permute.xlu0 %923
        %925 = vrot.lane.b32.xlu0 %v545, 109
        %v926 = vpop.permute.xlu0 %925
        %927 = vrot.lane.b32.xlu0 %v546, 109
        %v928 = vpop.permute.xlu0 %927
        %929 = vrot.lane.b32.xlu0 %v542, 109
        %v930 = vpop.permute.xlu0 %929
        %931 = vrot.lane.b32.xlu0 %v560, 109
        %v932 = vpop.permute.xlu0 %931
        %933 = vrot.lane.b32.xlu0 %v561, 109
        %v934 = vpop.permute.xlu0 %933
        %935 = vrot.lane.b32.xlu0 %v562, 109
        %v936 = vpop.permute.xlu0 %935
        %937 = vrot.lane.b32.xlu0 %v558, 109
        %v938 = vpop.permute.xlu0 %937
        %939 = vrot.lane.b32.xlu0 %v775, 109
        %v940 = vpop.permute.xlu0 %939
        %941 = vrot.lane.b32.xlu0 %v783, 109
        %v942 = vpop.permute.xlu0 %941
        %943 = vrot.lane.b32.xlu0 %v784, 109
        %v944 = vpop.permute.xlu0 %943
        %945 = vrot.lane.b32.xlu0 %v785, 109
        %v946 = vpop.permute.xlu0 %945
        %947 = vrot.lane.b32.xlu0 %v787, 109
        %v948 = vpop.permute.xlu0 %947
        %949 = vrot.lane.b32.xlu0 %v795, 109
        %v950 = vpop.permute.xlu0 %949
        %951 = vrot.lane.b32.xlu0 %v796, 109
        %v952 = vpop.permute.xlu0 %951
        %953 = vrot.lane.b32.xlu0 %v797, 109
        %v954 = vpop.permute.xlu0 %953
        %955 = vrot.lane.b32.xlu0 %v799, 109
        %v956 = vpop.permute.xlu0 %955
        %957 = vrot.lane.b32.xlu0 %v807, 109
        %v958 = vpop.permute.xlu0 %957
        %959 = vrot.lane.b32.xlu0 %v808, 109
        %v960 = vpop.permute.xlu0 %959
        %961 = vrot.lane.b32.xlu0 %v809, 109
        %v962 = vpop.permute.xlu0 %961
        %963 = vrot.lane.b32.xlu0 %v811, 109
        %v964 = vpop.permute.xlu0 %963
        %965 = vrot.lane.b32.xlu0 %v819, 109
        %v966 = vpop.permute.xlu0 %965
        %967 = vrot.lane.b32.xlu0 %v820, 109
        %v968 = vpop.permute.xlu0 %967
        %969 = vrot.lane.b32.xlu0 %v821, 109
        %v970 = vpop.permute.xlu0 %969
        %971 = vrot.lane.b32.xlu0 %v766, 109
        %v972 = vpop.permute.xlu0 %971
        %973 = vrot.lane.b32.xlu0 %v767, 109
        %v974 = vpop.permute.xlu0 %973
        %975 = vrot.lane.b32.xlu0 %v768, 109
        %v976 = vpop.permute.xlu0 %975
        %977 = vrot.lane.b32.xlu0 %v769, 109
        %v978 = vpop.permute.xlu0 %977
        %979 = vrot.lane.b32.xlu0 %v830, 109
        %v980 = vpop.permute.xlu0 %979
        %981 = vrot.lane.b32.xlu0 %v831, 109
        %v982 = vpop.permute.xlu0 %981
        %983 = vrot.lane.b32.xlu0 %v832, 109
        %v984 = vpop.permute.xlu0 %983
        %985 = vrot.lane.b32.xlu0 %v829, 109
        %v986 = vpop.permute.xlu0 %985
        %987 = vrot.lane.b32.xlu0 %v842, 109
        %v988 = vpop.permute.xlu0 %987
        %989 = vrot.lane.b32.xlu0 %v843, 109
        %v990 = vpop.permute.xlu0 %989
        %991 = vrot.lane.b32.xlu0 %v844, 109
        %v992 = vpop.permute.xlu0 %991
        %993 = vrot.lane.b32.xlu0 %v840, 109
        %v994 = vpop.permute.xlu0 %993
        %995 = vrot.lane.b32.xlu0 %v861, 109
        %v996 = vpop.permute.xlu0 %995
        %997 = vrot.lane.b32.xlu0 %v862, 109
        %v998 = vpop.permute.xlu0 %997
        %999 = vrot.lane.b32.xlu0 %v863, 109
        %v1000 = vpop.permute.xlu0 %999
        %1001 = vrot.lane.b32.xlu0 %v852, 109
        %v1002 = vpop.permute.xlu0 %1001
        %1003 = vrot.lane.b32.xlu0 %v864, 109
        %v1004 = vpop.permute.xlu0 %1003
        %1005 = vrot.lane.b32.xlu0 %v865, 109
        %v1006 = vpop.permute.xlu0 %1005
        %1007 = vrot.lane.b32.xlu0 %v866, 109
        %v1008 = vpop.permute.xlu0 %1007
        %1009 = vrot.lane.b32.xlu0 %v860, 109
        %v1010 = vpop.permute.xlu0 %1009
        %v1011 = vsel %vm495, %v876, %v878
        %v1012 = vsel %vm495, %v878, %v880
        %v1013 = vsel %vm495, %v880, %v882
        %v1014 = vsel %vm495, %v884, %v886
        %v1015 = vsel %vm495, %v886, %v888
        %v1016 = vsel %vm495, %v888, %v890
        %v1017 = vsel %vm495, %v892, %v894
        %v1018 = vsel %vm495, %v894, %v896
        %v1019 = vsel %vm495, %v896, %v898
        %v1020 = vsel %vm495, %v900, %v902
        %v1021 = vsel %vm495, %v902, %v904
        %v1022 = vsel %vm495, %v904, %v906
        %v1023 = vsel %vm495, %v908, %v910
        %v1024 = vsel %vm495, %v910, %v912
        %v1025 = vsel %vm495, %v912, %v914
        %v1026 = vsel %vm495, %v916, %v918
        %v1027 = vsel %vm495, %v918, %v920
        %v1028 = vsel %vm495, %v920, %v922
        %v1029 = vsel %vm495, %v924, %v926
        %v1030 = vsel %vm495, %v926, %v928
        %v1031 = vsel %vm495, %v928, %v930
        %v1032 = vsel %vm495, %v932, %v934
        %v1033 = vsel %vm495, %v934, %v936
        %v1034 = vsel %vm495, %v936, %v938
        %v1035 = vsel %vm495, %v940, %v942
        %v1036 = vsel %vm495, %v942, %v944
        %v1037 = vsel %vm495, %v944, %v946
        %v1038 = vsel %vm495, %v948, %v950
        %v1039 = vsel %vm495, %v950, %v952
        %v1040 = vsel %vm495, %v952, %v954
        %v1041 = vsel %vm495, %v956, %v958
        %v1042 = vsel %vm495, %v958, %v960
        %v1043 = vsel %vm495, %v960, %v962
        %v1044 = vsel %vm495, %v964, %v966
        %v1045 = vsel %vm495, %v966, %v968
        %v1046 = vsel %vm495, %v968, %v970
        %v1047 = vsel %vm495, %v972, %v974
        %v1048 = vsel %vm495, %v974, %v976
        %v1049 = vsel %vm495, %v976, %v978
        %v1050 = vsel %vm495, %v980, %v982
        %v1051 = vsel %vm495, %v982, %v984
        %v1052 = vsel %vm495, %v984, %v986
        %v1053 = vsel %vm495, %v988, %v990
        %v1054 = vsel %vm495, %v990, %v992
        %v1055 = vsel %vm495, %v992, %v994
        %v1056 = vsel %vm495, %v996, %v998
        %v1057 = vsel %vm495, %v998, %v1000
        %v1058 = vsel %vm495, %v1000, %v1002
        %v1059 = vsel %vm495, %v1004, %v1006
        %v1060 = vsel %vm495, %v1006, %v1008
        %v1061 = vsel %vm495, %v1008, %v1010
        %vm1130 = vcmask 130048
        %v1132 = vsel %vm1130, %v868, 0
        %1134 = vmatprep.subr.mxu0 %v497
        %1135 = vmatpush1.msra.mxu0 %v496
        %1136 = vmatprep.subr.mxu0 %v1012
        %1137 = vmatpush1.msra.mxu0 %v1011
        %1138 = vmatprep.subr.mxu0 %v1015
        %1139 = vmatpush1.msra.mxu0 %v1014
        %1140 = vmatprep.subr.mxu0 %v1018
        %1141 = vmatpush1.msra.mxu0 %v1017
        %1142 = vmatprep.subr.mxu0 %v1021
        %1143 = vmatpush1.msra.mxu0 %v1020
        %1144 = vmatprep.subr.mxu0 %v1024
        %1145 = vmatpush1.msra.mxu0 %v1023
        %1146 = vmatprep.subr.mxu0 %v1027
        %1147 = vmatpush1.msra.mxu0 %v1026
        %1148 = vmatprep.subr.mxu0 %v1030
        %1149 = vmatpush1.msra.mxu0 %v1029
        %1150 = vmatprep.subr.mxu0 %v1033
        %1151 = vmatpush1.msra.mxu0 %v1032
        %1152 = vmatprep.subr.mxu0 %v1036
        %1153 = vmatpush1.msra.mxu0 %v1035
        %1154 = vmatprep.subr.mxu0 %v1039
        %1155 = vmatpush1.msra.mxu0 %v1038
        %1156 = vmatprep.subr.mxu0 %v1042
        %1157 = vmatpush1.msra.mxu0 %v1041
        %1158 = vmatprep.subr.mxu0 %v1045
        %1159 = vmatpush1.msra.mxu0 %v1044
        %1160 = vmatprep.subr.mxu0 %v1048
        %1161 = vmatpush1.msra.mxu0 %v1047
        %1162 = vmatprep.subr.mxu0 %v1051
        %1163 = vmatpush1.msra.mxu0 %v1050
        %1164 = vmatprep.subr.mxu0 %v1054
        %1165 = vmatpush1.msra.mxu0 %v1053
        %1166 = vmatprep.subr.mxu0 %v1057
        %1167 = vmatpush1.msra.mxu0 %v1056
        %1168 = vmatprep.subr.mxu0 %v1060
        %1169 = vmatpush1.msra.mxu0 %v1059
        %1170 = vmatprep.subr.mxu0 0.0
        %1171 = vmatpush1.msra.mxu0 0.0
        %1172 = vmatprep.subr.mxu0 0.0
        %1173 = vmatpush1.msra.mxu0 0.0
        %1174 = vmatprep.subr.mxu0 0.0
        %1175 = vmatpush1.msra.mxu0 0.0
        %1176 = vmatprep.subr.mxu0 0.0
        %1177 = vmatpush1.msra.mxu0 0.0
        %1178 = vmatprep.subr.mxu0 0.0
        %1179 = vmatpush1.msra.mxu0 0.0
        %1180 = vmatprep.subr.mxu0 0.0
        %1181 = vmatpush1.msra.mxu0 0.0
        %1182 = vmatprep.subr.mxu0 0.0
        %1183 = vmatpush1.msra.mxu0 0.0
        %1184 = vmatprep.subr.mxu0 0.0
        %1185 = vmatpush1.msra.mxu0 0.0
        %1186 = vmatprep.subr.mxu0 0.0
        %1187 = vmatpush1.msra.mxu0 0.0
        %1188 = vmatprep.subr.mxu0 0.0
        %1189 = vmatpush1.msra.mxu0 0.0
        %1190 = vmatprep.subr.mxu0 0.0
        %1191 = vmatpush1.msra.mxu0 0.0
        %1192 = vmatprep.subr.mxu0 0.0
        %1193 = vmatpush1.msra.mxu0 0.0
        %1194 = vmatprep.subr.mxu0 0.0
        %1195 = vmatpush1.msra.mxu0 0.0
        %1196 = vmatprep.subr.mxu0 0.0
        %1197 = vmatpush1.msra.mxu0 0.0
        %1198 = vmatprep.mubr.f32.mxu0 %v1132
        %1199 = vmatmul.mubr.f32.gmra.mrb[0].mxu0 %v867
        %v1200 = vpop.f32.mrb[0].mxu0
        %v1201 = vadd.f32 %v873, %v1200
        %v1202 = vpop.f32.mrb[0].mxu0
        %v1203 = vadd.f32 %v873, %v1202
        %1204 = vdwg.mxu0
        %1205 = vmatprep.subr.mxu0 %v494
        %1206 = vmatpush1.msra.mxu0 %v498
        %1207 = vmatprep.subr.mxu0 %v882
        %1208 = vmatpush1.msra.mxu0 %v1013
        %1209 = vmatprep.subr.mxu0 %v890
        %1210 = vmatpush1.msra.mxu0 %v1016
        %1211 = vmatprep.subr.mxu0 %v898
        %1212 = vmatpush1.msra.mxu0 %v1019
        %1213 = vmatprep.subr.mxu0 %v906
        %1214 = vmatpush1.msra.mxu0 %v1022
        %1215 = vmatprep.subr.mxu0 %v914
        %1216 = vmatpush1.msra.mxu0 %v1025
        %1217 = vmatprep.subr.mxu0 %v922
        %1218 = vmatpush1.msra.mxu0 %v1028
        %1219 = vmatprep.subr.mxu0 %v930
        %1220 = vmatpush1.msra.mxu0 %v1031
        %1221 = vmatprep.subr.mxu0 %v938
        %1222 = vmatpush1.msra.mxu0 %v1034
        %1223 = vmatprep.subr.mxu0 %v946
        %1224 = vmatpush1.msra.mxu0 %v1037
        %1225 = vmatprep.subr.mxu0 %v954
        %1226 = vmatpush1.msra.mxu0 %v1040
        %1227 = vmatprep.subr.mxu0 %v962
        %1228 = vmatpush1.msra.mxu0 %v1043
        %1229 = vmatprep.subr.mxu0 %v970
        %1230 = vmatpush1.msra.mxu0 %v1046
        %1231 = vmatprep.subr.mxu0 %v978
        %1232 = vmatpush1.msra.mxu0 %v1049
        %1233 = vmatprep.subr.mxu0 %v986
        %1234 = vmatpush1.msra.mxu0 %v1052
        %1235 = vmatprep.subr.mxu0 %v994
        %1236 = vmatpush1.msra.mxu0 %v1055
        %1237 = vmatprep.subr.mxu0 %v1002
        %1238 = vmatpush1.msra.mxu0 %v1058
        %1239 = vmatprep.subr.mxu0 %v1010
        %1240 = vmatpush1.msra.mxu0 %v1061
        %1241 = vmatprep.subr.mxu0 0.0
        %1242 = vmatpush1.msra.mxu0 0.0
        %1243 = vmatprep.subr.mxu0 0.0
        %1244 = vmatpush1.msra.mxu0 0.0
        %1245 = vmatprep.subr.mxu0 0.0
        %1246 = vmatpush1.msra.mxu0 0.0
        %1247 = vmatprep.subr.mxu0 0.0
        %1248 = vmatpush1.msra.mxu0 0.0
        %1249 = vmatprep.subr.mxu0 0.0
        %1250 = vmatpush1.msra.mxu0 0.0
        %1251 = vmatprep.subr.mxu0 0.0
        %1252 = vmatpush1.msra.mxu0 0.0
        %1253 = vmatprep.subr.mxu0 0.0
        %1254 = vmatpush1.msra.mxu0 0.0
        %1255 = vmatprep.subr.mxu0 0.0
        %1256 = vmatpush1.msra.mxu0 0.0
        %1257 = vmatprep.subr.mxu0 0.0
        %1258 = vmatpush1.msra.mxu0 0.0
        %1259 = vmatprep.subr.mxu0 0.0
        %1260 = vmatpush1.msra.mxu0 0.0
        %1261 = vmatprep.subr.mxu0 0.0
        %1262 = vmatpush1.msra.mxu0 0.0
        %1263 = vmatprep.subr.mxu0 0.0
        %1264 = vmatpush1.msra.mxu0 0.0
        %1265 = vmatprep.subr.mxu0 0.0
        %1266 = vmatpush1.msra.mxu0 0.0
        %1267 = vmatprep.subr.mxu0 0.0
        %1268 = vmatpush1.msra.mxu0 0.0
        %1269 = vmatprep.mubr.f32.mxu0 %v1132
        %1270 = vmatmul.mubr.f32.gmra.mrb[0].mxu0 %v867
        %v1271 = vpop.f32.mrb[0].mxu0
        %v1272 = vadd.f32 %v873, %v1271
        %v1273 = vpop.f32.mrb[0].mxu0
        %v1274 = vadd.f32 %v873, %v1273
        %1275 = vdwg.mxu0
        %s1276 = sld [smem:[#allocation8 + $0x1]]
        %vm1277 = vcmp.ge.f32.partialorder %v1201, 0.0
        %vm1278 = vcmp.ge.f32.partialorder %v1203, 0.0
        %vm1279 = vcmp.ge.f32.partialorder %v1272, 0.0
        %vm1280 = vcmp.ge.f32.partialorder %v1274, 0.0
        %v1281 = vstv %s1276
        %v1282 = vmul.f32 %v1281, %v1201
        %v1283 = vmul.f32 %v1281, %v1203
        %v1284 = vmul.f32 %v1281, %v1272
        %v1285 = vmul.f32 %v1281, %v1274
        %v1286 = vsel %vm1277, %v1201, %v1282
        %v1287 = vsel %vm1278, %v1203, %v1283
        %v1288 = vsel %vm1279, %v1272, %v1284
        %v1289 = vsel %vm1280, %v1274, %v1285
        %1290 = vrot.lane.b32.xlu0 %v738, 90
        %v1291 = vpop.permute.xlu0 %1290
        %1292 = vrot.lane.b32.xlu0 %v742, 90
        %v1293 = vpop.permute.xlu0 %1292
        %1294 = vrot.lane.b32.xlu0 %v746, 90
        %v1295 = vpop.permute.xlu0 %1294
        %1296 = vrot.lane.b32.xlu0 %v750, 90
        %v1297 = vpop.permute.xlu0 %1296
        %v1298 = vsel %vm559, %v1291, %v1293
        %v1299 = vsel %vm559, %v1293, %v1295
        %v1300 = vsel %vm559, %v1295, %v1297
        %v1305 = vmul.f32 %v1286, %v1298
        %v1306 = vmul.f32 %v1287, %v1299
        %v1307 = vmul.f32 %v1288, %v1300
        %v1308 = vmul.f32 %v1289, %v1297
        %1312 = vrot.lane.b32.xlu0 %v1305, 56
        %v1313 = vpop.permute.xlu0 %1312
        %1314 = vrot.lane.b32.xlu0 %v1306, 56
        %v1315 = vpop.permute.xlu0 %1314
        %1316 = vrot.lane.b32.xlu0 %v1307, 56
        %v1317 = vpop.permute.xlu0 %1316
        %vm1318 = vcmask 457728
        %v1319 = vsel %vm1318, %v1313, %v1315
        %v1320 = vsel %vm1318, %v1315, %v1317
        %1321 = vrot.lane.b32.xlu0 %v1305, 55
        %v1322 = vpop.permute.xlu0 %1321
        %1323 = vrot.lane.b32.xlu0 %v1306, 55
        %v1324 = vpop.permute.xlu0 %1323
        %1325 = vrot.lane.b32.xlu0 %v1307, 55
        %v1326 = vpop.permute.xlu0 %1325
        %vm1327 = vcmask 449536
        %v1328 = vsel %vm1327, %v1322, %v1324
        %v1329 = vsel %vm1327, %v1324, %v1326
        %1330 = vrot.lane.b32.xlu0 %v1305, 54
        %v1331 = vpop.permute.xlu0 %1330
        %1332 = vrot.lane.b32.xlu0 %v1306, 54
        %v1333 = vpop.permute.xlu0 %1332
        %1334 = vrot.lane.b32.xlu0 %v1307, 54
        %v1335 = vpop.permute.xlu0 %1334
        %vm1336 = vcmask 441344
        %v1337 = vsel %vm1336, %v1331, %v1333
        %v1338 = vsel %vm1336, %v1333, %v1335
        %1339 = vrot.lane.b32.xlu0 %v1305, 38
        %v1340 = vpop.permute.xlu0 %1339
        %1341 = vrot.lane.b32.xlu0 %v1306, 38
        %v1342 = vpop.permute.xlu0 %1341
        %1343 = vrot.lane.b32.xlu0 %v1307, 38
        %v1344 = vpop.permute.xlu0 %1343
        %vm1345 = vcmask 310272
        %v1346 = vsel %vm1345, %v1340, %v1342
        %v1347 = vsel %vm1345, %v1342, %v1344
        %1348 = vrot.lane.b32.xlu0 %v1305, 37
        %v1349 = vpop.permute.xlu0 %1348
        %1350 = vrot.lane.b32.xlu0 %v1306, 37
        %v1351 = vpop.permute.xlu0 %1350
        %1352 = vrot.lane.b32.xlu0 %v1307, 37
        %v1353 = vpop.permute.xlu0 %1352
        %vm1354 = vcmask 302080
        %v1355 = vsel %vm1354, %v1349, %v1351
        %v1356 = vsel %vm1354, %v1351, %v1353
        %1357 = vrot.lane.b32.xlu0 %v1305, 36
        %v1358 = vpop.permute.xlu0 %1357
        %1359 = vrot.lane.b32.xlu0 %v1306, 36
        %v1360 = vpop.permute.xlu0 %1359
        %1361 = vrot.lane.b32.xlu0 %v1307, 36
        %v1362 = vpop.permute.xlu0 %1361
        %vm1363 = vcmask 293888
        %v1364 = vsel %vm1363, %v1358, %v1360
        %v1365 = vsel %vm1363, %v1360, %v1362
        %1367 = vrot.lane.b32.xlu0 %v1305, 20
        %v1368 = vpop.permute.xlu0 %1367
        %1369 = vrot.lane.b32.xlu0 %v1306, 20
        %v1370 = vpop.permute.xlu0 %1369
        %1371 = vrot.lane.b32.xlu0 %v1307, 20
        %v1372 = vpop.permute.xlu0 %1371
        %1373 = vrot.lane.b32.xlu0 %v1308, 20
        %v1374 = vpop.permute.xlu0 %1373
        %vm1375 = vcmask 162816
        %v1376 = vsel %vm1375, %v1368, %v1370
        %v1377 = vsel %vm1375, %v1370, %v1372
        %v1378 = vsel %vm1375, %v1372, %v1374
        %1379 = vrot.lane.b32.xlu0 %v1305, 19
        %v1380 = vpop.permute.xlu0 %1379
        %1381 = vrot.lane.b32.xlu0 %v1306, 19
        %v1382 = vpop.permute.xlu0 %1381
        %1383 = vrot.lane.b32.xlu0 %v1307, 19
        %v1384 = vpop.permute.xlu0 %1383
        %1385 = vrot.lane.b32.xlu0 %v1308, 19
        %v1386 = vpop.permute.xlu0 %1385
        %v1387 = vsel %vm782, %v1380, %v1382
        %v1388 = vsel %vm782, %v1382, %v1384
        %v1389 = vsel %vm782, %v1384, %v1386
        %1390 = vrot.lane.b32.xlu0 %v1305, 18
        %v1391 = vpop.permute.xlu0 %1390
        %1392 = vrot.lane.b32.xlu0 %v1306, 18
        %v1393 = vpop.permute.xlu0 %1392
        %1394 = vrot.lane.b32.xlu0 %v1307, 18
        %v1395 = vpop.permute.xlu0 %1394
        %1396 = vrot.lane.b32.xlu0 %v1308, 18
        %v1397 = vpop.permute.xlu0 %1396
        %v1398 = vsel %vm794, %v1391, %v1393
        %v1399 = vsel %vm794, %v1393, %v1395
        %v1400 = vsel %vm794, %v1395, %v1397
        %1401 = vrot.lane.b32.xlu0 %v1313, 110
        %v1402 = vpop.permute.xlu0 %1401
        %1403 = vrot.lane.b32.xlu0 %v1319, 110
        %v1404 = vpop.permute.xlu0 %1403
        %1405 = vrot.lane.b32.xlu0 %v1320, 110
        %v1406 = vpop.permute.xlu0 %1405
        %1407 = vrot.lane.b32.xlu0 %v1317, 110
        %v1408 = vpop.permute.xlu0 %1407
        %1409 = vrot.lane.b32.xlu0 %v1322, 110
        %v1410 = vpop.permute.xlu0 %1409
        %1411 = vrot.lane.b32.xlu0 %v1328, 110
        %v1412 = vpop.permute.xlu0 %1411
        %1413 = vrot.lane.b32.xlu0 %v1329, 110
        %v1414 = vpop.permute.xlu0 %1413
        %1415 = vrot.lane.b32.xlu0 %v1326, 110
        %v1416 = vpop.permute.xlu0 %1415
        %1417 = vrot.lane.b32.xlu0 %v1331, 110
        %v1418 = vpop.permute.xlu0 %1417
        %1419 = vrot.lane.b32.xlu0 %v1337, 110
        %v1420 = vpop.permute.xlu0 %1419
        %1421 = vrot.lane.b32.xlu0 %v1338, 110
        %v1422 = vpop.permute.xlu0 %1421
        %1423 = vrot.lane.b32.xlu0 %v1335, 110
        %v1424 = vpop.permute.xlu0 %1423
        %1425 = vrot.lane.b32.xlu0 %v1340, 110
        %v1426 = vpop.permute.xlu0 %1425
        %1427 = vrot.lane.b32.xlu0 %v1346, 110
        %v1428 = vpop.permute.xlu0 %1427
        %1429 = vrot.lane.b32.xlu0 %v1347, 110
        %v1430 = vpop.permute.xlu0 %1429
        %1431 = vrot.lane.b32.xlu0 %v1344, 110
        %v1432 = vpop.permute.xlu0 %1431
        %1433 = vrot.lane.b32.xlu0 %v1349, 110
        %v1434 = vpop.permute.xlu0 %1433
        %1435 = vrot.lane.b32.xlu0 %v1355, 110
        %v1436 = vpop.permute.xlu0 %1435
        %1437 = vrot.lane.b32.xlu0 %v1356, 110
        %v1438 = vpop.permute.xlu0 %1437
        %1439 = vrot.lane.b32.xlu0 %v1353, 110
        %v1440 = vpop.permute.xlu0 %1439
        %1441 = vrot.lane.b32.xlu0 %v1358, 110
        %v1442 = vpop.permute.xlu0 %1441
        %1443 = vrot.lane.b32.xlu0 %v1364, 110
        %v1444 = vpop.permute.xlu0 %1443
        %1445 = vrot.lane.b32.xlu0 %v1365, 110
        %v1446 = vpop.permute.xlu0 %1445
        %1447 = vrot.lane.b32.xlu0 %v1362, 110
        %v1448 = vpop.permute.xlu0 %1447
        %1449 = vrot.lane.b32.xlu0 %v1368, 110
        %v1450 = vpop.permute.xlu0 %1449
        %1451 = vrot.lane.b32.xlu0 %v1376, 110
        %v1452 = vpop.permute.xlu0 %1451
        %1453 = vrot.lane.b32.xlu0 %v1377, 110
        %v1454 = vpop.permute.xlu0 %1453
        %1455 = vrot.lane.b32.xlu0 %v1378, 110
        %v1456 = vpop.permute.xlu0 %1455
        %1457 = vrot.lane.b32.xlu0 %v1380, 110
        %v1458 = vpop.permute.xlu0 %1457
        %1459 = vrot.lane.b32.xlu0 %v1387, 110
        %v1460 = vpop.permute.xlu0 %1459
        %1461 = vrot.lane.b32.xlu0 %v1388, 110
        %v1462 = vpop.permute.xlu0 %1461
        %1463 = vrot.lane.b32.xlu0 %v1389, 110
        %v1464 = vpop.permute.xlu0 %1463
        %1465 = vrot.lane.b32.xlu0 %v1391, 110
        %v1466 = vpop.permute.xlu0 %1465
        %1467 = vrot.lane.b32.xlu0 %v1398, 110
        %v1468 = vpop.permute.xlu0 %1467
        %1469 = vrot.lane.b32.xlu0 %v1399, 110
        %v1470 = vpop.permute.xlu0 %1469
        %1471 = vrot.lane.b32.xlu0 %v1400, 110
        %v1472 = vpop.permute.xlu0 %1471
        %v1473 = vsel %vm479, %v1402, %v1404
        %v1474 = vsel %vm479, %v1404, %v1406
        %v1475 = vsel %vm479, %v1406, %v1408
        %v1476 = vsel %vm479, %v1410, %v1412
        %v1477 = vsel %vm479, %v1412, %v1414
        %v1478 = vsel %vm479, %v1414, %v1416
        %v1479 = vsel %vm479, %v1418, %v1420
        %v1480 = vsel %vm479, %v1420, %v1422
        %v1481 = vsel %vm479, %v1422, %v1424
        %v1482 = vsel %vm479, %v1426, %v1428
        %v1483 = vsel %vm479, %v1428, %v1430
        %v1484 = vsel %vm479, %v1430, %v1432
        %v1485 = vsel %vm479, %v1434, %v1436
        %v1486 = vsel %vm479, %v1436, %v1438
        %v1487 = vsel %vm479, %v1438, %v1440
        %v1488 = vsel %vm479, %v1442, %v1444
        %v1489 = vsel %vm479, %v1444, %v1446
        %v1490 = vsel %vm479, %v1446, %v1448
        %v1491 = vsel %vm479, %v1450, %v1452
        %v1492 = vsel %vm479, %v1452, %v1454
        %v1493 = vsel %vm479, %v1454, %v1456
        %v1494 = vsel %vm479, %v1458, %v1460
        %v1495 = vsel %vm479, %v1460, %v1462
        %v1496 = vsel %vm479, %v1462, %v1464
        %v1497 = vsel %vm479, %v1466, %v1468
        %v1498 = vsel %vm479, %v1468, %v1470
        %v1499 = vsel %vm479, %v1470, %v1472
        %v1500 = vld [vmem:[%s6] sm:$0xff]
        %v1501 = vld [vmem:[%s6 + $0x8] sm:$0xff]
        %v1502 = vld [vmem:[%s7] sm:$0xff]
        %1504 = vset.pattern.permute.xlu0 0
        %1505 = vperm.xlu0 %1504, %v1502
        %v1506 = vpop.permute.xlu0 %1505
        %1508 = vrot.lane.b32.xlu0 %v448, 90
        %v1509 = vpop.permute.xlu0 %1508
        %1510 = vrot.lane.b32.xlu0 %v449, 90
        %v1511 = vpop.permute.xlu0 %1510
        %1512 = vrot.lane.b32.xlu0 %v450, 90
        %v1513 = vpop.permute.xlu0 %1512
        %1514 = vrot.lane.b32.xlu0 %v446, 90
        %v1515 = vpop.permute.xlu0 %1514
        %1516 = vrot.lane.b32.xlu0 %v464, 90
        %v1517 = vpop.permute.xlu0 %1516
        %1518 = vrot.lane.b32.xlu0 %v465, 90
        %v1519 = vpop.permute.xlu0 %1518
        %1520 = vrot.lane.b32.xlu0 %v466, 90
        %v1521 = vpop.permute.xlu0 %1520
        %1522 = vrot.lane.b32.xlu0 %v462, 90
        %v1523 = vpop.permute.xlu0 %1522
        %1524 = vrot.lane.b32.xlu0 %v480, 90
        %v1525 = vpop.permute.xlu0 %1524
        %1526 = vrot.lane.b32.xlu0 %v481, 90
        %v1527 = vpop.permute.xlu0 %1526
        %1528 = vrot.lane.b32.xlu0 %v482, 90
        %v1529 = vpop.permute.xlu0 %1528
        %1530 = vrot.lane.b32.xlu0 %v478, 90
        %v1531 = vpop.permute.xlu0 %1530
        %1532 = vrot.lane.b32.xlu0 %v496, 90
        %v1533 = vpop.permute.xlu0 %1532
        %1534 = vrot.lane.b32.xlu0 %v497, 90
        %v1535 = vpop.permute.xlu0 %1534
        %1536 = vrot.lane.b32.xlu0 %v498, 90
        %v1537 = vpop.permute.xlu0 %1536
        %1538 = vrot.lane.b32.xlu0 %v494, 90
        %v1539 = vpop.permute.xlu0 %1538
        %1540 = vrot.lane.b32.xlu0 %v512, 90
        %v1541 = vpop.permute.xlu0 %1540
        %1542 = vrot.lane.b32.xlu0 %v513, 90
        %v1543 = vpop.permute.xlu0 %1542
        %1544 = vrot.lane.b32.xlu0 %v514, 90
        %v1545 = vpop.permute.xlu0 %1544
        %1546 = vrot.lane.b32.xlu0 %v510, 90
        %v1547 = vpop.permute.xlu0 %1546
        %1548 = vrot.lane.b32.xlu0 %v528, 90
        %v1549 = vpop.permute.xlu0 %1548
        %1550 = vrot.lane.b32.xlu0 %v529, 90
        %v1551 = vpop.permute.xlu0 %1550
        %1552 = vrot.lane.b32.xlu0 %v530, 90
        %v1553 = vpop.permute.xlu0 %1552
        %1554 = vrot.lane.b32.xlu0 %v526, 90
        %v1555 = vpop.permute.xlu0 %1554
        %1556 = vrot.lane.b32.xlu0 %v544, 90
        %v1557 = vpop.permute.xlu0 %1556
        %1558 = vrot.lane.b32.xlu0 %v545, 90
        %v1559 = vpop.permute.xlu0 %1558
        %1560 = vrot.lane.b32.xlu0 %v546, 90
        %v1561 = vpop.permute.xlu0 %1560
        %1562 = vrot.lane.b32.xlu0 %v542, 90
        %v1563 = vpop.permute.xlu0 %1562
        %1564 = vrot.lane.b32.xlu0 %v560, 90
        %v1565 = vpop.permute.xlu0 %1564
        %1566 = vrot.lane.b32.xlu0 %v561, 90
        %v1567 = vpop.permute.xlu0 %1566
        %1568 = vrot.lane.b32.xlu0 %v562, 90
        %v1569 = vpop.permute.xlu0 %1568
        %1570 = vrot.lane.b32.xlu0 %v558, 90
        %v1571 = vpop.permute.xlu0 %1570
        %1572 = vrot.lane.b32.xlu0 %v775, 90
        %v1573 = vpop.permute.xlu0 %1572
        %1574 = vrot.lane.b32.xlu0 %v783, 90
        %v1575 = vpop.permute.xlu0 %1574
        %1576 = vrot.lane.b32.xlu0 %v784, 90
        %v1577 = vpop.permute.xlu0 %1576
        %1578 = vrot.lane.b32.xlu0 %v779, 90
        %v1579 = vpop.permute.xlu0 %1578
        %1580 = vrot.lane.b32.xlu0 %v787, 90
        %v1581 = vpop.permute.xlu0 %1580
        %1582 = vrot.lane.b32.xlu0 %v795, 90
        %v1583 = vpop.permute.xlu0 %1582
        %1584 = vrot.lane.b32.xlu0 %v796, 90
        %v1585 = vpop.permute.xlu0 %1584
        %1586 = vrot.lane.b32.xlu0 %v791, 90
        %v1587 = vpop.permute.xlu0 %1586
        %1588 = vrot.lane.b32.xlu0 %v799, 90
        %v1589 = vpop.permute.xlu0 %1588
        %1590 = vrot.lane.b32.xlu0 %v807, 90
        %v1591 = vpop.permute.xlu0 %1590
        %1592 = vrot.lane.b32.xlu0 %v808, 90
        %v1593 = vpop.permute.xlu0 %1592
        %1594 = vrot.lane.b32.xlu0 %v803, 90
        %v1595 = vpop.permute.xlu0 %1594
        %1596 = vrot.lane.b32.xlu0 %v811, 90
        %v1597 = vpop.permute.xlu0 %1596
        %1598 = vrot.lane.b32.xlu0 %v819, 90
        %v1599 = vpop.permute.xlu0 %1598
        %1600 = vrot.lane.b32.xlu0 %v820, 90
        %v1601 = vpop.permute.xlu0 %1600
        %1602 = vrot.lane.b32.xlu0 %v821, 90
        %v1603 = vpop.permute.xlu0 %1602
        %1604 = vrot.lane.b32.xlu0 %v766, 90
        %v1605 = vpop.permute.xlu0 %1604
        %1606 = vrot.lane.b32.xlu0 %v767, 90
        %v1607 = vpop.permute.xlu0 %1606
        %1608 = vrot.lane.b32.xlu0 %v768, 90
        %v1609 = vpop.permute.xlu0 %1608
        %1610 = vrot.lane.b32.xlu0 %v769, 90
        %v1611 = vpop.permute.xlu0 %1610
        %1612 = vrot.lane.b32.xlu0 %v830, 90
        %v1613 = vpop.permute.xlu0 %1612
        %1614 = vrot.lane.b32.xlu0 %v831, 90
        %v1615 = vpop.permute.xlu0 %1614
        %1616 = vrot.lane.b32.xlu0 %v832, 90
        %v1617 = vpop.permute.xlu0 %1616
        %1618 = vrot.lane.b32.xlu0 %v829, 90
        %v1619 = vpop.permute.xlu0 %1618
        %1620 = vrot.lane.b32.xlu0 %v842, 90
        %v1621 = vpop.permute.xlu0 %1620
        %1622 = vrot.lane.b32.xlu0 %v843, 90
        %v1623 = vpop.permute.xlu0 %1622
        %1624 = vrot.lane.b32.xlu0 %v844, 90
        %v1625 = vpop.permute.xlu0 %1624
        %1626 = vrot.lane.b32.xlu0 %v840, 90
        %v1627 = vpop.permute.xlu0 %1626
        %1628 = vrot.lane.b32.xlu0 %v861, 90
        %v1629 = vpop.permute.xlu0 %1628
        %1630 = vrot.lane.b32.xlu0 %v862, 90
        %v1631 = vpop.permute.xlu0 %1630
        %1632 = vrot.lane.b32.xlu0 %v863, 90
        %v1633 = vpop.permute.xlu0 %1632
        %1634 = vrot.lane.b32.xlu0 %v852, 90
        %v1635 = vpop.permute.xlu0 %1634
        %1636 = vrot.lane.b32.xlu0 %v864, 90
        %v1637 = vpop.permute.xlu0 %1636
        %1638 = vrot.lane.b32.xlu0 %v865, 90
        %v1639 = vpop.permute.xlu0 %1638
        %1640 = vrot.lane.b32.xlu0 %v866, 90
        %v1641 = vpop.permute.xlu0 %1640
        %1642 = vrot.lane.b32.xlu0 %v860, 90
        %v1643 = vpop.permute.xlu0 %1642
        %1644 = vrot.lane.b32.xlu0 %v1473, 90
        %v1645 = vpop.permute.xlu0 %1644
        %1646 = vrot.lane.b32.xlu0 %v1474, 90
        %v1647 = vpop.permute.xlu0 %1646
        %1648 = vrot.lane.b32.xlu0 %v1475, 90
        %v1649 = vpop.permute.xlu0 %1648
        %1650 = vrot.lane.b32.xlu0 %v1408, 90
        %v1651 = vpop.permute.xlu0 %1650
        %1652 = vrot.lane.b32.xlu0 %v1476, 90
        %v1653 = vpop.permute.xlu0 %1652
        %1654 = vrot.lane.b32.xlu0 %v1477, 90
        %v1655 = vpop.permute.xlu0 %1654
        %1656 = vrot.lane.b32.xlu0 %v1478, 90
        %v1657 = vpop.permute.xlu0 %1656
        %1658 = vrot.lane.b32.xlu0 %v1416, 90
        %v1659 = vpop.permute.xlu0 %1658
        %1660 = vrot.lane.b32.xlu0 %v1479, 90
        %v1661 = vpop.permute.xlu0 %1660
        %1662 = vrot.lane.b32.xlu0 %v1480, 90
        %v1663 = vpop.permute.xlu0 %1662
        %1664 = vrot.lane.b32.xlu0 %v1481, 90
        %v1665 = vpop.permute.xlu0 %1664
        %1666 = vrot.lane.b32.xlu0 %v1424, 90
        %v1667 = vpop.permute.xlu0 %1666
        %1668 = vrot.lane.b32.xlu0 %v1482, 90
        %v1669 = vpop.permute.xlu0 %1668
        %1670 = vrot.lane.b32.xlu0 %v1483, 90
        %v1671 = vpop.permute.xlu0 %1670
        %1672 = vrot.lane.b32.xlu0 %v1484, 90
        %v1673 = vpop.permute.xlu0 %1672
        %1674 = vrot.lane.b32.xlu0 %v1432, 90
        %v1675 = vpop.permute.xlu0 %1674
        %1676 = vrot.lane.b32.xlu0 %v1485, 90
        %v1677 = vpop.permute.xlu0 %1676
        %1678 = vrot.lane.b32.xlu0 %v1486, 90
        %v1679 = vpop.permute.xlu0 %1678
        %1680 = vrot.lane.b32.xlu0 %v1487, 90
        %v1681 = vpop.permute.xlu0 %1680
        %1682 = vrot.lane.b32.xlu0 %v1440, 90
        %v1683 = vpop.permute.xlu0 %1682
        %1684 = vrot.lane.b32.xlu0 %v1488, 90
        %v1685 = vpop.permute.xlu0 %1684
        %1686 = vrot.lane.b32.xlu0 %v1489, 90
        %v1687 = vpop.permute.xlu0 %1686
        %1688 = vrot.lane.b32.xlu0 %v1490, 90
        %v1689 = vpop.permute.xlu0 %1688
        %1690 = vrot.lane.b32.xlu0 %v1448, 90
        %v1691 = vpop.permute.xlu0 %1690
        %1692 = vrot.lane.b32.xlu0 %v1491, 90
        %v1693 = vpop.permute.xlu0 %1692
        %1694 = vrot.lane.b32.xlu0 %v1492, 90
        %v1695 = vpop.permute.xlu0 %1694
        %1696 = vrot.lane.b32.xlu0 %v1493, 90
        %v1697 = vpop.permute.xlu0 %1696
        %1698 = vrot.lane.b32.xlu0 %v1456, 90
        %v1699 = vpop.permute.xlu0 %1698
        %1700 = vrot.lane.b32.xlu0 %v1494, 90
        %v1701 = vpop.permute.xlu0 %1700
        %1702 = vrot.lane.b32.xlu0 %v1495, 90
        %v1703 = vpop.permute.xlu0 %1702
        %1704 = vrot.lane.b32.xlu0 %v1496, 90
        %v1705 = vpop.permute.xlu0 %1704
        %1706 = vrot.lane.b32.xlu0 %v1464, 90
        %v1707 = vpop.permute.xlu0 %1706
        %1708 = vrot.lane.b32.xlu0 %v1497, 90
        %v1709 = vpop.permute.xlu0 %1708
        %1710 = vrot.lane.b32.xlu0 %v1498, 90
        %v1711 = vpop.permute.xlu0 %1710
        %1712 = vrot.lane.b32.xlu0 %v1499, 90
        %v1713 = vpop.permute.xlu0 %1712
        %1714 = vrot.lane.b32.xlu0 %v1472, 90
        %v1715 = vpop.permute.xlu0 %1714
        %v1716 = vsel %vm559, %v1509, %v1511
        %v1717 = vsel %vm559, %v1511, %v1513
        %v1718 = vsel %vm559, %v1513, %v1515
        %v1719 = vsel %vm559, %v1517, %v1519
        %v1720 = vsel %vm559, %v1519, %v1521
        %v1721 = vsel %vm559, %v1521, %v1523
        %v1722 = vsel %vm559, %v1525, %v1527
        %v1723 = vsel %vm559, %v1527, %v1529
        %v1724 = vsel %vm559, %v1529, %v1531
        %v1725 = vsel %vm559, %v1533, %v1535
        %v1726 = vsel %vm559, %v1535, %v1537
        %v1727 = vsel %vm559, %v1537, %v1539
        %v1728 = vsel %vm559, %v1541, %v1543
        %v1729 = vsel %vm559, %v1543, %v1545
        %v1730 = vsel %vm559, %v1545, %v1547
        %v1731 = vsel %vm559, %v1549, %v1551
        %v1732 = vsel %vm559, %v1551, %v1553
        %v1733 = vsel %vm559, %v1553, %v1555
        %v1734 = vsel %vm559, %v1557, %v1559
        %v1735 = vsel %vm559, %v1559, %v1561
        %v1736 = vsel %vm559, %v1561, %v1563
        %v1737 = vsel %vm559, %v1565, %v1567
        %v1738 = vsel %vm559, %v1567, %v1569
        %v1739 = vsel %vm559, %v1569, %v1571
        %v1740 = vsel %vm559, %v1573, %v1575
        %v1741 = vsel %vm559, %v1575, %v1577
        %v1742 = vsel %vm559, %v1577, %v1579
        %v1743 = vsel %vm559, %v1581, %v1583
        %v1744 = vsel %vm559, %v1583, %v1585
        %v1745 = vsel %vm559, %v1585, %v1587
        %v1746 = vsel %vm559, %v1589, %v1591
        %v1747 = vsel %vm559, %v1591, %v1593
        %v1748 = vsel %vm559, %v1593, %v1595
        %v1749 = vsel %vm559, %v1597, %v1599
        %v1750 = vsel %vm559, %v1599, %v1601
        %v1751 = vsel %vm559, %v1601, %v1603
        %v1752 = vsel %vm559, %v1605, %v1607
        %v1753 = vsel %vm559, %v1607, %v1609
        %v1754 = vsel %vm559, %v1609, %v1611
        %v1755 = vsel %vm559, %v1613, %v1615
        %v1756 = vsel %vm559, %v1615, %v1617
        %v1757 = vsel %vm559, %v1617, %v1619
        %v1758 = vsel %vm559, %v1621, %v1623
        %v1759 = vsel %vm559, %v1623, %v1625
        %v1760 = vsel %vm559, %v1625, %v1627
        %v1761 = vsel %vm559, %v1629, %v1631
        %v1762 = vsel %vm559, %v1631, %v1633
        %v1763 = vsel %vm559, %v1633, %v1635
        %v1764 = vsel %vm559, %v1637, %v1639
        %v1765 = vsel %vm559, %v1639, %v1641
        %v1766 = vsel %vm559, %v1641, %v1643
        %v1767 = vsel %vm559, %v1645, %v1647
        %v1768 = vsel %vm559, %v1647, %v1649
        %v1769 = vsel %vm559, %v1649, %v1651
        %v1770 = vsel %vm559, %v1653, %v1655
        %v1771 = vsel %vm559, %v1655, %v1657
        %v1772 = vsel %vm559, %v1657, %v1659
        %v1773 = vsel %vm559, %v1661, %v1663
        %v1774 = vsel %vm559, %v1663, %v1665
        %v1775 = vsel %vm559, %v1665, %v1667
        %v1776 = vsel %vm559, %v1669, %v1671
        %v1777 = vsel %vm559, %v1671, %v1673
        %v1778 = vsel %vm559, %v1673, %v1675
        %v1779 = vsel %vm559, %v1677, %v1679
        %v1780 = vsel %vm559, %v1679, %v1681
        %v1781 = vsel %vm559, %v1681, %v1683
        %v1782 = vsel %vm559, %v1685, %v1687
        %v1783 = vsel %vm559, %v1687, %v1689
        %v1784 = vsel %vm559, %v1689, %v1691
        %v1785 = vsel %vm559, %v1693, %v1695
        %v1786 = vsel %vm559, %v1695, %v1697
        %v1787 = vsel %vm559, %v1697, %v1699
        %v1788 = vsel %vm559, %v1701, %v1703
        %v1789 = vsel %vm559, %v1703, %v1705
        %v1790 = vsel %vm559, %v1705, %v1707
        %v1791 = vsel %vm559, %v1709, %v1711
        %v1792 = vsel %vm559, %v1711, %v1713
        %v1793 = vsel %vm559, %v1713, %v1715
        %vm1872 = vcmask 719872
        %v1874 = vsel %vm1872, %v1501, 0
        %1876 = vmatprep.subr.mxu0 %v561
        %1877 = vmatpush1.msra.mxu0 %v560
        %1878 = vmatprep.subr.mxu0 %v1717
        %1879 = vmatpush1.msra.mxu0 %v1716
        %1880 = vmatprep.subr.mxu0 %v1720
        %1881 = vmatpush1.msra.mxu0 %v1719
        %1882 = vmatprep.subr.mxu0 %v1723
        %1883 = vmatpush1.msra.mxu0 %v1722
        %1884 = vmatprep.subr.mxu0 %v1726
        %1885 = vmatpush1.msra.mxu0 %v1725
        %1886 = vmatprep.subr.mxu0 %v1729
        %1887 = vmatpush1.msra.mxu0 %v1728
        %1888 = vmatprep.subr.mxu0 %v1732
        %1889 = vmatpush1.msra.mxu0 %v1731
        %1890 = vmatprep.subr.mxu0 %v1735
        %1891 = vmatpush1.msra.mxu0 %v1734
        %1892 = vmatprep.subr.mxu0 %v1738
        %1893 = vmatpush1.msra.mxu0 %v1737
        %1894 = vmatprep.subr.mxu0 %v1741
        %1895 = vmatpush1.msra.mxu0 %v1740
        %1896 = vmatprep.subr.mxu0 %v1744
        %1897 = vmatpush1.msra.mxu0 %v1743
        %1898 = vmatprep.subr.mxu0 %v1747
        %1899 = vmatpush1.msra.mxu0 %v1746
        %1900 = vmatprep.subr.mxu0 %v1750
        %1901 = vmatpush1.msra.mxu0 %v1749
        %1902 = vmatprep.subr.mxu0 %v1753
        %1903 = vmatpush1.msra.mxu0 %v1752
        %1904 = vmatprep.subr.mxu0 %v1756
        %1905 = vmatpush1.msra.mxu0 %v1755
        %1906 = vmatprep.subr.mxu0 %v1759
        %1907 = vmatpush1.msra.mxu0 %v1758
        %1908 = vmatprep.subr.mxu0 %v1762
        %1909 = vmatpush1.msra.mxu0 %v1761
        %1910 = vmatprep.subr.mxu0 %v1765
        %1911 = vmatpush1.msra.mxu0 %v1764
        %1912 = vmatprep.subr.mxu0 %v1768
        %1913 = vmatpush1.msra.mxu0 %v1767
        %1914 = vmatprep.subr.mxu0 %v1771
        %1915 = vmatpush1.msra.mxu0 %v1770
        %1916 = vmatprep.subr.mxu0 %v1774
        %1917 = vmatpush1.msra.mxu0 %v1773
        %1918 = vmatprep.subr.mxu0 %v1777
        %1919 = vmatpush1.msra.mxu0 %v1776
        %1920 = vmatprep.subr.mxu0 %v1780
        %1921 = vmatpush1.msra.mxu0 %v1779
        %1922 = vmatprep.subr.mxu0 %v1783
        %1923 = vmatpush1.msra.mxu0 %v1782
        %1924 = vmatprep.subr.mxu0 %v1786
        %1925 = vmatpush1.msra.mxu0 %v1785
        %1926 = vmatprep.subr.mxu0 %v1789
        %1927 = vmatpush1.msra.mxu0 %v1788
        %1928 = vmatprep.subr.mxu0 %v1792
        %1929 = vmatpush1.msra.mxu0 %v1791
        %1930 = vmatprep.subr.mxu0 0.0
        %1931 = vmatpush1.msra.mxu0 0.0
        %1932 = vmatprep.subr.mxu0 0.0
        %1933 = vmatpush1.msra.mxu0 0.0
        %1934 = vmatprep.subr.mxu0 0.0
        %1935 = vmatpush1.msra.mxu0 0.0
        %1936 = vmatprep.subr.mxu0 0.0
        %1937 = vmatpush1.msra.mxu0 0.0
        %1938 = vmatprep.subr.mxu0 0.0
        %1939 = vmatpush1.msra.mxu0 0.0
        %1940 = vmatprep.mubr.f32.mxu0 %v1874
        %1941 = vmatmul.mubr.f32.gmra.mrb[0].mxu0 %v1500
        %v1942 = vpop.f32.mrb[0].mxu0
        %v1943 = vadd.f32 %v1506, %v1942
        %v1944 = vpop.f32.mrb[0].mxu0
        %v1945 = vadd.f32 %v1506, %v1944
        %1946 = vdwg.mxu0
        %1947 = vmatprep.subr.mxu0 0.0
        %1948 = vmatpush1.msra.mxu0 %v562
        %1949 = vmatprep.subr.mxu0 0.0
        %1950 = vmatpush1.msra.mxu0 %v1718
        %1951 = vmatprep.subr.mxu0 0.0
        %1952 = vmatpush1.msra.mxu0 %v1721
        %1953 = vmatprep.subr.mxu0 0.0
        %1954 = vmatpush1.msra.mxu0 %v1724
        %1955 = vmatprep.subr.mxu0 0.0
        %1956 = vmatpush1.msra.mxu0 %v1727
        %1957 = vmatprep.subr.mxu0 0.0
        %1958 = vmatpush1.msra.mxu0 %v1730
        %1959 = vmatprep.subr.mxu0 0.0
        %1960 = vmatpush1.msra.mxu0 %v1733
        %1961 = vmatprep.subr.mxu0 0.0
        %1962 = vmatpush1.msra.mxu0 %v1736
        %1963 = vmatprep.subr.mxu0 0.0
        %1964 = vmatpush1.msra.mxu0 %v1739
        %1965 = vmatprep.subr.mxu0 0.0
        %1966 = vmatpush1.msra.mxu0 %v1742
        %1967 = vmatprep.subr.mxu0 0.0
        %1968 = vmatpush1.msra.mxu0 %v1745
        %1969 = vmatprep.subr.mxu0 0.0
        %1970 = vmatpush1.msra.mxu0 %v1748
        %1971 = vmatprep.subr.mxu0 0.0
        %1972 = vmatpush1.msra.mxu0 %v1751
        %1973 = vmatprep.subr.mxu0 0.0
        %1974 = vmatpush1.msra.mxu0 %v1754
        %1975 = vmatprep.subr.mxu0 0.0
        %1976 = vmatpush1.msra.mxu0 %v1757
        %1977 = vmatprep.subr.mxu0 0.0
        %1978 = vmatpush1.msra.mxu0 %v1760
        %1979 = vmatprep.subr.mxu0 0.0
        %1980 = vmatpush1.msra.mxu0 %v1763
        %1981 = vmatprep.subr.mxu0 0.0
        %1982 = vmatpush1.msra.mxu0 %v1766
        %1983 = vmatprep.subr.mxu0 0.0
        %1984 = vmatpush1.msra.mxu0 %v1769
        %1985 = vmatprep.subr.mxu0 0.0
        %1986 = vmatpush1.msra.mxu0 %v1772
        %1987 = vmatprep.subr.mxu0 0.0
        %1988 = vmatpush1.msra.mxu0 %v1775
        %1989 = vmatprep.subr.mxu0 0.0
        %1990 = vmatpush1.msra.mxu0 %v1778
        %1991 = vmatprep.subr.mxu0 0.0
        %1992 = vmatpush1.msra.mxu0 %v1781
        %1993 = vmatprep.subr.mxu0 0.0
        %1994 = vmatpush1.msra.mxu0 %v1784
        %1995 = vmatprep.subr.mxu0 0.0
        %1996 = vmatpush1.msra.mxu0 %v1787
        %1997 = vmatprep.subr.mxu0 0.0
        %1998 = vmatpush1.msra.mxu0 %v1790
        %1999 = vmatprep.subr.mxu0 0.0
        %2000 = vmatpush1.msra.mxu0 %v1793
        %2001 = vmatprep.subr.mxu0 0.0
        %2002 = vmatpush1.msra.mxu0 0.0
        %2003 = vmatprep.subr.mxu0 0.0
        %2004 = vmatpush1.msra.mxu0 0.0
        %2005 = vmatprep.subr.mxu0 0.0
        %2006 = vmatpush1.msra.mxu0 0.0
        %2007 = vmatprep.subr.mxu0 0.0
        %2008 = vmatpush1.msra.mxu0 0.0
        %2009 = vmatprep.subr.mxu0 0.0
        %2010 = vmatpush1.msra.mxu0 0.0
        %2011 = vmatprep.mubr.f32.mxu0 %v1874
        %2012 = vmatmul.mubr.f32.gmra.mrb[0].mxu0 %v1500
        %v2013 = vpop.f32.mrb[0].mxu0
        %v2014 = vadd.f32 %v1506, %v2013
        %v2015 = vpop.f32.mrb[0].mxu0
        %2016 = vdwg.mxu0
        %s2017 = sld [smem:[#allocation8 + $0x2]]
        %vm2018 = vcmp.ge.f32.partialorder %v1943, 0.0
        %vm2019 = vcmp.ge.f32.partialorder %v1945, 0.0
        %vm2020 = vcmp.ge.f32.partialorder %v2014, 0.0
        %v2021 = vstv %s2017
        %v2022 = vmul.f32 %v2021, %v1943
        %v2023 = vmul.f32 %v2021, %v1945
        %v2024 = vmul.f32 %v2021, %v2014
        %v2025 = vsel %vm2018, %v1943, %v2022
        %v2026 = vsel %vm2019, %v1945, %v2023
        %v2027 = vsel %vm2020, %v2014, %v2024
        %2028 = vrot.lane.b32.xlu0 %v738, 71
        %v2029 = vpop.permute.xlu0 %2028
        %2030 = vrot.lane.b32.xlu0 %v742, 71
        %v2031 = vpop.permute.xlu0 %2030
        %2032 = vrot.lane.b32.xlu0 %v746, 71
        %v2033 = vpop.permute.xlu0 %2032
        %2034 = vrot.lane.b32.xlu0 %v750, 71
        %v2035 = vpop.permute.xlu0 %2034
        %vm2036 = vcmask 580608
        %v2037 = vsel %vm2036, %v2029, %v2031
        %v2038 = vsel %vm2036, %v2031, %v2033
        %v2039 = vsel %vm2036, %v2033, %v2035
        %v2043 = vmul.f32 %v2025, %v2037
        %v2044 = vmul.f32 %v2026, %v2038
        %v2045 = vmul.f32 %v2027, %v2039
        %2046 = vrot.lane.b32.xlu0 %v430, 71
        %v2047 = vpop.permute.xlu0 %2046
        %2048 = vrot.lane.b32.xlu0 %v431, 71
        %v2049 = vpop.permute.xlu0 %2048
        %2050 = vrot.lane.b32.xlu0 %v432, 71
        %v2051 = vpop.permute.xlu0 %2050
        %2052 = vrot.lane.b32.xlu0 %v433, 71
        %v2053 = vpop.permute.xlu0 %2052
        %v2054 = vsel %vm2036, %v2047, %v2049
        %v2055 = vsel %vm2036, %v2049, %v2051
        %v2056 = vsel %vm2036, %v2051, %v2053
        %v2060 = vadd.f32 %v2043, %v2054
        %v2061 = vadd.f32 %v2044, %v2055
        %v2062 = vadd.f32 %v2045, %v2056
        %2066 = vrot.lane.b32.xlu0 %v2060, 127
        %v2067 = vpop.permute.xlu0 %2066
        %2068 = vrot.lane.b32.xlu0 %v2061, 127
        %v2069 = vpop.permute.xlu0 %2068
        %2070 = vrot.lane.b32.xlu0 %v2062, 127
        %v2071 = vpop.permute.xlu0 %2070
        %v2072 = vsel %vm447, %v2067, %v2069
        %v2073 = vsel %vm447, %v2069, %v2071
        %2077 = vrot.lane.b32.xlu0 %v2060, 126
        %v2078 = vpop.permute.xlu0 %2077
        %2079 = vrot.lane.b32.xlu0 %v2061, 126
        %v2080 = vpop.permute.xlu0 %2079
        %2081 = vrot.lane.b32.xlu0 %v2062, 126
        %v2082 = vpop.permute.xlu0 %2081
        %v2083 = vsel %vm463, %v2078, %v2080
        %v2084 = vsel %vm463, %v2080, %v2082
        %2088 = vrot.lane.b32.xlu0 %v2060, 110
        %v2089 = vpop.permute.xlu0 %2088
        %2090 = vrot.lane.b32.xlu0 %v2061, 110
        %v2091 = vpop.permute.xlu0 %2090
        %2092 = vrot.lane.b32.xlu0 %v2062, 110
        %v2093 = vpop.permute.xlu0 %2092
        %v2094 = vsel %vm479, %v2089, %v2091
        %v2095 = vsel %vm479, %v2091, %v2093
        %2099 = vrot.lane.b32.xlu0 %v2060, 109
        %v2100 = vpop.permute.xlu0 %2099
        %2101 = vrot.lane.b32.xlu0 %v2061, 109
        %v2102 = vpop.permute.xlu0 %2101
        %2103 = vrot.lane.b32.xlu0 %v2062, 109
        %v2104 = vpop.permute.xlu0 %2103
        %v2105 = vsel %vm495, %v2100, %v2102
        %v2106 = vsel %vm495, %v2102, %v2104
        %2110 = vrot.lane.b32.xlu0 %v2060, 108
        %v2111 = vpop.permute.xlu0 %2110
        %2112 = vrot.lane.b32.xlu0 %v2061, 108
        %v2113 = vpop.permute.xlu0 %2112
        %2114 = vrot.lane.b32.xlu0 %v2062, 108
        %v2115 = vpop.permute.xlu0 %2114
        %v2116 = vsel %vm511, %v2111, %v2113
        %v2117 = vsel %vm511, %v2113, %v2115
        %2121 = vrot.lane.b32.xlu0 %v2060, 92
        %v2122 = vpop.permute.xlu0 %2121
        %2123 = vrot.lane.b32.xlu0 %v2061, 92
        %v2124 = vpop.permute.xlu0 %2123
        %2125 = vrot.lane.b32.xlu0 %v2062, 92
        %v2126 = vpop.permute.xlu0 %2125
        %v2127 = vsel %vm527, %v2122, %v2124
        %v2128 = vsel %vm527, %v2124, %v2126
        %2132 = vrot.lane.b32.xlu0 %v2060, 91
        %v2133 = vpop.permute.xlu0 %2132
        %2134 = vrot.lane.b32.xlu0 %v2061, 91
        %v2135 = vpop.permute.xlu0 %2134
        %2136 = vrot.lane.b32.xlu0 %v2062, 91
        %v2137 = vpop.permute.xlu0 %2136
        %v2138 = vsel %vm543, %v2133, %v2135
        %v2139 = vsel %vm543, %v2135, %v2137
        %2143 = vrot.lane.b32.xlu0 %v2060, 90
        %v2144 = vpop.permute.xlu0 %2143
        %2145 = vrot.lane.b32.xlu0 %v2061, 90
        %v2146 = vpop.permute.xlu0 %2145
        %2147 = vrot.lane.b32.xlu0 %v2062, 90
        %v2148 = vpop.permute.xlu0 %2147
        %v2149 = vsel %vm559, %v2144, %v2146
        %v2150 = vsel %vm559, %v2146, %v2148
        %v2154 = vld [vmem:[%s8] sm:$0xff]
        %v2155 = vld [vmem:[%s9] sm:$0xff]
        %2157 = vset.pattern.permute.xlu0 0
        %2158 = vperm.xlu0 %2157, %v2155
        %v2159 = vpop.permute.xlu0 %2158
        %v2162 = vsel %vm574, %v2154, 0
        %2164 = vmatprep.subr.mxu0 %v2061
        %2165 = vmatpush1.msra.mxu0 %v2060
        %2166 = vmatprep.subr.mxu0 %v2073
        %2167 = vmatpush1.msra.mxu0 %v2072
        %2168 = vmatprep.subr.mxu0 %v2084
        %2169 = vmatpush1.msra.mxu0 %v2083
        %2170 = vmatprep.subr.mxu0 %v2095
        %2171 = vmatpush1.msra.mxu0 %v2094
        %2172 = vmatprep.subr.mxu0 %v2106
        %2173 = vmatpush1.msra.mxu0 %v2105
        %2174 = vmatprep.subr.mxu0 %v2117
        %2175 = vmatpush1.msra.mxu0 %v2116
        %2176 = vmatprep.subr.mxu0 %v2128
        %2177 = vmatpush1.msra.mxu0 %v2127
        %2178 = vmatprep.subr.mxu0 %v2139
        %2179 = vmatpush1.msra.mxu0 %v2138
        %2180 = vmatprep.subr.mxu0 %v2150
        %2181 = vmatpush1.msra.mxu0 %v2149
        %2182 = vmatprep.subr.mxu0 0.0
        %2183 = vmatpush1.msra.mxu0 0.0
        %2184 = vmatprep.subr.mxu0 0.0
        %2185 = vmatpush1.msra.mxu0 0.0
        %2186 = vmatprep.subr.mxu0 0.0
        %2187 = vmatpush1.msra.mxu0 0.0
        %2188 = vmatprep.subr.mxu0 0.0
        %2189 = vmatpush1.msra.mxu0 0.0
        %2190 = vmatprep.subr.mxu0 0.0
        %2191 = vmatpush1.msra.mxu0 0.0
        %2192 = vmatprep.subr.mxu0 0.0
        %2193 = vmatpush1.msra.mxu0 0.0
        %2194 = vmatprep.subr.mxu0 0.0
        %2195 = vmatpush1.msra.mxu0 0.0
        %2196 = vmatprep.subr.mxu0 0.0
        %2197 = vmatpush1.msra.mxu0 0.0
        %2198 = vmatprep.subr.mxu0 0.0
        %2199 = vmatpush1.msra.mxu0 0.0
        %2200 = vmatprep.subr.mxu0 0.0
        %2201 = vmatpush1.msra.mxu0 0.0
        %2202 = vmatprep.subr.mxu0 0.0
        %2203 = vmatpush1.msra.mxu0 0.0
        %2204 = vmatprep.subr.mxu0 0.0
        %2205 = vmatpush1.msra.mxu0 0.0
        %2206 = vmatprep.subr.mxu0 0.0
        %2207 = vmatpush1.msra.mxu0 0.0
        %2208 = vmatprep.subr.mxu0 0.0
        %2209 = vmatpush1.msra.mxu0 0.0
        %2210 = vmatprep.subr.mxu0 0.0
        %2211 = vmatpush1.msra.mxu0 0.0
        %2212 = vmatprep.subr.mxu0 0.0
        %2213 = vmatpush1.msra.mxu0 0.0
        %2214 = vmatprep.subr.mxu0 0.0
        %2215 = vmatpush1.msra.mxu0 0.0
        %2216 = vmatprep.subr.mxu0 0.0
        %2217 = vmatpush1.msra.mxu0 0.0
        %2218 = vmatprep.subr.mxu0 0.0
        %2219 = vmatpush1.msra.mxu0 0.0
        %2220 = vmatprep.subr.mxu0 0.0
        %2221 = vmatpush1.msra.mxu0 0.0
        %2222 = vmatprep.subr.mxu0 0.0
        %2223 = vmatpush1.msra.mxu0 0.0
        %2224 = vmatprep.subr.mxu0 0.0
        %2225 = vmatpush1.msra.mxu0 0.0
        %2226 = vmatprep.subr.mxu0 0.0
        %2227 = vmatpush1.msra.mxu0 0.0
        %2228 = vmatprep.mubr.f32.mxu0 0.0
        %2229 = vmatmul.mubr.f32.gmra.mrb[0].mxu0 %v2162
        %v2230 = vpop.f32.mrb[0].mxu0
        %v2231 = vadd.f32 %v2159, %v2230
        %v2232 = vpop.f32.mrb[0].mxu0
        %v2233 = vadd.f32 %v2159, %v2232
        %2234 = vdwg.mxu0
        %2235 = vmatprep.subr.mxu0 0.0
        %2236 = vmatpush1.msra.mxu0 %v2062
        %2237 = vmatprep.subr.mxu0 0.0
        %2238 = vmatpush1.msra.mxu0 %v2071
        %2239 = vmatprep.subr.mxu0 0.0
        %2240 = vmatpush1.msra.mxu0 %v2082
        %2241 = vmatprep.subr.mxu0 0.0
        %2242 = vmatpush1.msra.mxu0 %v2093
        %2243 = vmatprep.subr.mxu0 0.0
        %2244 = vmatpush1.msra.mxu0 %v2104
        %2245 = vmatprep.subr.mxu0 0.0
        %2246 = vmatpush1.msra.mxu0 %v2115
        %2247 = vmatprep.subr.mxu0 0.0
        %2248 = vmatpush1.msra.mxu0 %v2126
        %2249 = vmatprep.subr.mxu0 0.0
        %2250 = vmatpush1.msra.mxu0 %v2137
        %2251 = vmatprep.subr.mxu0 0.0
        %2252 = vmatpush1.msra.mxu0 %v2148
        %2253 = vmatprep.subr.mxu0 0.0
        %2254 = vmatpush1.msra.mxu0 0.0
        %2255 = vmatprep.subr.mxu0 0.0
        %2256 = vmatpush1.msra.mxu0 0.0
        %2257 = vmatprep.subr.mxu0 0.0
        %2258 = vmatpush1.msra.mxu0 0.0
        %2259 = vmatprep.subr.mxu0 0.0
        %2260 = vmatpush1.msra.mxu0 0.0
        %2261 = vmatprep.subr.mxu0 0.0
        %2262 = vmatpush1.msra.mxu0 0.0
        %2263 = vmatprep.subr.mxu0 0.0
        %2264 = vmatpush1.msra.mxu0 0.0
        %2265 = vmatprep.subr.mxu0 0.0
        %2266 = vmatpush1.msra.mxu0 0.0
        %2267 = vmatprep.subr.mxu0 0.0
        %2268 = vmatpush1.msra.mxu0 0.0
        %2269 = vmatprep.subr.mxu0 0.0
        %2270 = vmatpush1.msra.mxu0 0.0
        %2271 = vmatprep.subr.mxu0 0.0
        %2272 = vmatpush1.msra.mxu0 0.0
        %2273 = vmatprep.subr.mxu0 0.0
        %2274 = vmatpush1.msra.mxu0 0.0
        %2275 = vmatprep.subr.mxu0 0.0
        %2276 = vmatpush1.msra.mxu0 0.0
        %2277 = vmatprep.subr.mxu0 0.0
        %2278 = vmatpush1.msra.mxu0 0.0
        %2279 = vmatprep.subr.mxu0 0.0
        %2280 = vmatpush1.msra.mxu0 0.0
        %2281 = vmatprep.subr.mxu0 0.0
        %2282 = vmatpush1.msra.mxu0 0.0
        %2283 = vmatprep.subr.mxu0 0.0
        %2284 = vmatpush1.msra.mxu0 0.0
        %2285 = vmatprep.subr.mxu0 0.0
        %2286 = vmatpush1.msra.mxu0 0.0
        %2287 = vmatprep.subr.mxu0 0.0
        %2288 = vmatpush1.msra.mxu0 0.0
        %2289 = vmatprep.subr.mxu0 0.0
        %2290 = vmatpush1.msra.mxu0 0.0
        %2291 = vmatprep.subr.mxu0 0.0
        %2292 = vmatpush1.msra.mxu0 0.0
        %2293 = vmatprep.subr.mxu0 0.0
        %2294 = vmatpush1.msra.mxu0 0.0
        %2295 = vmatprep.subr.mxu0 0.0
        %2296 = vmatpush1.msra.mxu0 0.0
        %2297 = vmatprep.subr.mxu0 0.0
        %2298 = vmatpush1.msra.mxu0 0.0
        %2299 = vmatprep.mubr.f32.mxu0 0.0
        %2300 = vmatmul.mubr.f32.gmra.mrb[0].mxu0 %v2162
        %v2301 = vpop.f32.mrb[0].mxu0
        %v2302 = vadd.f32 %v2159, %v2301
        %v2303 = vpop.f32.mrb[0].mxu0
        %2304 = vdwg.mxu0
        %v2305 = vmax.f32 %v2231, 0.0
        %v2306 = vmax.f32 %v2233, 0.0
        %v2307 = vmax.f32 %v2302, 0.0
        %2308 = vst [vmem:[%s429] sm:$0xff] %v2305
        %2309 = vst [vmem:[%s429 + $0x8] sm:$0xff] %v2306
        %vm2310 = vcmask 556032
        %2311 = vst.msk [vmem:[%s429 + $0x10] sm:$0xff] %vm2310, %v2307
        %s2312 = sand.u32 %s274, 1
        %s2313 = scalar_lea.sflag [#allocation4], %s2312
        %s2314 = sand.u32 %s274, 1
        %s2315 = smul.addr %s2314, 24
        %s2316 = scalar_lea.vmem [#allocation9], %s2315
        // Predicated region
        $region77: #{tpu_custom_call.1} parent=63 // pred_check
          %p2317 = pneg %p284
        $region78: #{tpu_custom_call.1} parent=63 // pred_check_branch
          %2319 = sbr.rel (%p2317) target = $region80
        $region79: #{tpu_custom_call.1} parent=63 // pred_region
          %s2321 = ssub.s32 384, 384
          %2322 = vsyncadd %s2313, %s2321
          %s2323 = smul.addr %s30, 3
          %s2324 = smul.addr %s2323, 128
          %s2325 = scalar_lea.hbm %s11, %s2324
          %s2327 = sshll.u32 %s2316, 4
          %s2328 = int_to_ptr.vmem [resolvable:$true] %s2327
          %2330 = dma.vmem_to_hbm [thread:$0]  %s2328, 384, %s2325, %s2313
        $region80: #{tpu_custom_call.1} parent=63 // pred_fallthru
          _
      $region64: #{tpu_custom_call.1} parent=5 // pred_fallthru
        _
      %p2331 = scmp.le.s32.totalorder 2, %s25
      // Predicated region
      $region81: #{tpu_custom_call.1} parent=5 // pred_check
        %p2332 = pneg %p2331
      $region82: #{tpu_custom_call.1} parent=5 // pred_check_branch
        %2334 = sbr.rel (%p2332) target = $region84
      $region83: #{tpu_custom_call.1} parent=5 // pred_region
        %s2335 = ssub.s32 %s25, 2
        // Predicated region
        $region85: #{tpu_custom_call.1} parent=83 // pred_check
          %p2336 = pneg %p290
        $region86: #{tpu_custom_call.1} parent=83 // pred_check_branch
          %2338 = sbr.rel (%p2336) target = $region88
        $region87: #{tpu_custom_call.1} parent=83 // pred_region
          %s2339 = sand.u32 %s275, 1
          %s2340 = scalar_lea.sflag [#allocation4], %s2339
          %s2341 = sand.u32 %s275, 1
          %s2342 = smul.addr %s2341, 24
          %s2343 = scalar_lea.vmem [#allocation9], %s2342
          %2344 = dma.done %s2340, 384
        $region88: #{tpu_custom_call.1} parent=83 // pred_fallthru
          _
      $region84: #{tpu_custom_call.1} parent=5 // pred_fallthru
        _
    $region6: #{tpu_custom_call.1} parent=1 // loop_footer
      %s29 = sadd.s32 1, %s25
    $region7: #{tpu_custom_call.1} parent=1 // loop_footer_branch
      %24 = sbr.rel target = $region3
    $region8: #{tpu_custom_call.1} parent=1 // loop_exit
      _
    %2345 = vsyncpa [#allocation3], 1
    %s2346 = scalar_lea.sflag [#allocation3], 1
    %2347 = vsyncpa %s2346, 1
    %2348 = vsyncpa [#allocation7], 1
    %2349 = vsyncpa [#allocation4], 1
    %s2350 = scalar_lea.sflag [#allocation4], 1
    %2351 = vsyncpa %s2350, 1
    %2352 = vsyncpa [#allocation5], 1
    %s2353 = scalar_lea.sflag [#allocation5], 1
    %2354 = vsyncpa %s2353, 1

</llo_original>
